<compile_context>
chip_gen: v5e
topology: v5e:2x2
jax: 0.10.0
libtpu: 0.0.40
codegen_flags: <defaults>
</compile_context>

<pallas_src>
import numpy as np
import jax
import jax.numpy as jnp
from jax.experimental import pallas as pl
from jax.experimental.pallas import tpu as pltpu

HIDDEN_DIM = 20
CHEB_K = 15


# ----------------------------------------------------------------------------
# Fused Pallas kernel (built as a closure over static slab offsets / dims)
# ----------------------------------------------------------------------------
def make_gcnnet_kernel(woff, boff, N, T, F, H, K):
    H2, H4, H6 = 2 * H, 4 * H, 6 * H
    f32, bf16 = jnp.float32, jnp.bfloat16

    def kernel(x_ref, w_ref, b_ref, out_ref):
        # static slices into the packed parameter slabs
        def wsl(name):
            s, r, c = woff[name]
            return w_ref[s:s + r, 0:c]

        def bsl(name):
            s, r, c = boff[name]
            return b_ref[s:s + r, 0:c]

        # ---------------- bidirectional GRU ----------------
        # One fused input projection for all T steps, both directions and all
        # three gates: [T*N, F] @ [F, 6H].  Gate layout: [r | z | n]; each gate
        # block is [fwd H | bwd H].  r/z biases (input + hidden) pre-summed.
        x_bf = x_ref[...].astype(bf16)
        xp = jnp.dot(x_bf, wsl("wi"), preferred_element_type=f32) + bsl("bi")  # [T*N, 6H]

        wh_all = wsl("wh")          # [2H, 6H] bf16 (block-diagonal per direction)
        bhn = bsl("bhn")            # [1, 2H]  hidden bias of n gate (kept split)

        # lane mask: inside every 2H gate block, first H lanes = forward dir.
        col = jax.lax.broadcasted_iota(jnp.int32, (N, H6), 1)
        fwd = (col % H2) < H

        # Both directions carried in one [N, 2H] state; ONE recurrent matmul per
        # step ([N,2H]@[2H,6H] = 120 output lanes).  T is static -> unrolled.
        h = jnp.zeros((N, H2), dtype=f32)
        for t in range(T):
            gi = jnp.where(fwd,
                           xp[t * N:(t + 1) * N],             # fwd reads x_t
                           xp[(T - 1 - t) * N:(T - t) * N])   # bwd reads x_{T-1-t}
            gh = jnp.dot(h.astype(bf16), wh_all, preferred_element_type=f32)  # [N, 6H]
            r = jax.nn.sigmoid(gi[:, 0:H2] + gh[:, 0:H2])
            z = jax.nn.sigmoid(gi[:, H2:2 * H2] + gh[:, H2:2 * H2])
            n = jnp.tanh(gi[:, 2 * H2:H6] + r * (gh[:, 2 * H2:H6] + bhn))
            h = (1.0 - z) * n + z * h

        # -------- torch h_n.view(N, 2H) + lstm_fc : 2 matmuls --------
        # m = [h_f@A | h_b@A | h_f@B | h_b@B] with fc_wt = [A; B]; restacking the
        # four lane blocks along sublanes gives w_stk = [h_stack@A ; h_stack@B],
        # and torch's row-major view satisfies x_fc[i] = w_stk[2i] + w_stk[2N+2i+1]
        # -> one constant-permutation dot.
        m = jnp.dot(h.astype(bf16), wsl("fc4"), preferred_element_type=f32)    # [N, 4H]
        m_bf = m.astype(bf16)
        w_stk = jnp.concatenate(
            [m_bf[:, 0:H], m_bf[:, H:H2], m_bf[:, H2:3 * H], m_bf[:, 3 * H:H4]],
            axis=0)                                                            # [4N, H]
        x_fc = (jnp.dot(wsl("pfull"), w_stk, preferred_element_type=f32)
                + bsl("fcb"))                                                  # [N, H]

        # -------- ChebConv(K) : 2 matmuls (no K-long serial chain) --------
        # xw[:, k*H:(k+1)*H] = x_fc @ W_k.T ; restack the K lane blocks along
        # sublanes, then contract once against [T_0 | ... | T_{K-1}] ([N, K*N]).
        xw = jnp.dot(x_fc.astype(bf16), wsl("chebw"), preferred_element_type=f32)  # [N, K*H]
        xw_bf = xw.astype(bf16)
        xw_r = jnp.concatenate([xw_bf[:, k * H:(k + 1) * H] for k in range(K)],
                               axis=0)                                         # [K*N, H]
        acc = (jnp.dot(wsl("ts"), xw_r, preferred_element_type=f32)
               + bsl("chebb"))                                                 # [N, H]
        acc = jnp.maximum(acc, 0.0)                                            # ReLU

        # -------- GCNConv: A_norm @ (x W) + b --------
        y = jnp.dot(acc.astype(bf16), wsl("gcnw"), preferred_element_type=f32)
        y = (jnp.dot(wsl("anorm"), y.astype(bf16), preferred_element_type=f32)
             + bsl("gcnb"))
        out_ref[...] = y

    return kernel


def build_gcnnet_forward(wslab, bslab, woff, boff, N, T, F, H, K):
    kernel = make_gcnnet_kernel(woff, boff, N, T, F, H, K)
    vmem = pl.BlockSpec(memory_space=pltpu.MemorySpace.VMEM)
    call = pl.pallas_call(
        kernel,
        out_shape=jax.ShapeDtypeStruct((N, H), jnp.float32),
        in_specs=[vmem, vmem, vmem],
        out_specs=vmem,
    )
    # TODO(synk): if many graphs/samples are processed per step, add a leading
    # grid axis with dimension_semantics=("parallel",) to use both v7x TCs.

    @jax.jit
    def _fwd(x, data, wslab_, bslab_):
        # ids = data[:, 0, 2].long(); add_x[ids] = data[:, :, :2]; x = (x+add_x)/2
        ids = data[:, 0, 2].astype(jnp.int32)
        add_x = x.at[ids].set(data[:, :, :2])
        xm = (x + add_x) / 2.0
        # time-major rows (t, n) so the kernel slices whole timesteps on sublanes
        x2d = jnp.transpose(xm, (1, 0, 2)).reshape(T * N, F)
        return call(x2d, wslab_, bslab_)

    return lambda x, data: _fwd(x, data, wslab, bslab)


# ----------------------------------------------------------------------------
# Host-side graph-operator construction (matches torch_geometric semantics)
# ----------------------------------------------------------------------------
def build_cheb_ts(edge_index, num_nodes, K):
    """[T_0 | T_1 | ... | T_{K-1}] of the ChebConv scaled Laplacian
    (sym normalization, lambda_max=2, no edge weights) -> [N, K*N]."""
    src, dst = np.asarray(edge_index[0]), np.asarray(edge_index[1])
    keep = src != dst                         # remove_self_loops
    src, dst = src[keep], dst[keep]
    w = np.ones(src.shape[0], np.float64)
    deg = np.zeros(num_nodes, np.float64)
    np.add.at(deg, src, w)                    # get_laplacian: deg from source
    dinv = np.where(deg > 0, deg ** -0.5, 0.0)
    norm = dinv[src] * w * dinv[dst]
    lhat = np.zeros((num_nodes, num_nodes), np.float64)
    np.add.at(lhat, (dst, src), -norm)        # (2/lambda_max)*L_sym - I -> zero diag
    mats = [np.eye(num_nodes), lhat]
    for _ in range(2, K):
        mats.append(2.0 * lhat @ mats[-1] - mats[-2])
    return np.concatenate(mats[:K], axis=1).astype(np.float32)   # [N, K*N]


def build_gcn_anorm(edge_index, num_nodes):
    """GCNConv gcn_norm with add_self_loops=True, improved=False, edge_weight=None."""
    src, dst = np.asarray(edge_index[0]), np.asarray(edge_index[1])
    keep = src != dst
    src = np.concatenate([src[keep], np.arange(num_nodes)])
    dst = np.concatenate([dst[keep], np.arange(num_nodes)])
    w = np.ones(src.shape[0], np.float64)
    deg = np.zeros(num_nodes, np.float64)
    np.add.at(deg, dst, w)                    # gcn_norm: deg from target
    dinv = np.where(deg > 0, deg ** -0.5, 0.0)
    norm = dinv[src] * w * dinv[dst]
    A = np.zeros((num_nodes, num_nodes), np.float64)
    np.add.at(A, (dst, src), norm)
    return A.astype(np.float32)


# ----------------------------------------------------------------------------
# Parameter packing: many small tensors -> two lane-dense slabs (fewer DMAs)
# ----------------------------------------------------------------------------
class _SlabBuilder:
    def __init__(self, lanes, row_align):
        self.lanes = lanes
        self.row_align = row_align
        self.rows = 0
        self.parts = []
        self.offsets = {}

    def add(self, name, arr):
        arr = np.asarray(arr, np.float32)
        r, c = arr.shape
        assert c <= self.lanes, (name, c, self.lanes)
        self.offsets[name] = (self.rows, r, c)
        self.parts.append(np.pad(arr, ((0, 0), (0, self.lanes - c))))
        self.rows += r
        pad = (-self.rows) % self.row_align       # keep every section row-aligned
        if pad:
            self.parts.append(np.zeros((pad, self.lanes), np.float32))
            self.rows += pad

    def build(self):
        return np.concatenate(self.parts, axis=0), self.offsets


def pack_params(raw, F, H, K, N, ts, anorm):
    H2, H4, H6 = 2 * H, 4 * H, 6 * H

    def gates(d):
        wih = raw[f"wih_{d}"].reshape(3, H, F)        # torch gate order (r, z, n)
        whh = raw[f"whh_{d}"].reshape(3, H, H)
        bih = raw[f"bih_{d}"].reshape(3, H)
        bhh = raw[f"bhh_{d}"].reshape(3, H)
        return np.transpose(wih, (0, 2, 1)), np.transpose(whh, (0, 2, 1)), bih, bhh

    wi_f, wh_f, bi_f, bh_f = gates("f")
    wi_b, wh_b, bi_b, bh_b = gates("b")

    # Fused GRU weights: lane layout [r | z | n], each gate block [fwd H | bwd H].
    wi_all = np.zeros((F, H6), np.float32)
    wh_all = np.zeros((H2, H6), np.float32)            # block-diag per direction
    bi_all = np.zeros((1, H6), np.float32)
    for g in range(3):
        c0 = g * H2
        wi_all[:, c0:c0 + H] = wi_f[g]
        wi_all[:, c0 + H:c0 + H2] = wi_b[g]
        wh_all[:H, c0:c0 + H] = wh_f[g]
        wh_all[H:, c0 + H:c0 + H2] = wh_b[g]
        if g < 2:                                      # r/z: biases pre-summed
            bi_all[0, c0:c0 + H] = bi_f[g] + bh_f[g]
            bi_all[0, c0 + H:c0 + H2] = bi_b[g] + bh_b[g]
        else:                                          # n: keep b_hn split
            bi_all[0, c0:c0 + H] = bi_f[g]
            bi_all[0, c0 + H:c0 + H2] = bi_b[g]
    bhn = np.concatenate([bh_f[2], bh_b[2]])[None, :]  # [1, 2H]

    # h_n.view(N, 2H) + lstm_fc collapsed to 2 matmuls:
    #   m = h @ W4 = [h_f@A | h_b@A | h_f@B | h_b@B]  with fc_wt = [A; B]
    #   x_fc[i] = w_stk[2i] + w_stk[2N + 2i + 1]      (w_stk = sublane restack)
    fc_wt = raw["fc_w"].T                              # [2H, H]
    A, B = fc_wt[:H], fc_wt[H:]
    w4 = np.zeros((H2, H4), np.float32)
    w4[:H, 0:H] = A
    w4[H:, H:H2] = A
    w4[:H, H2:3 * H] = B
    w4[H:, 3 * H:H4] = B
    pfull = np.zeros((N, 4 * N), np.float32)
    idx = np.arange(N)
    pfull[idx, 2 * idx] = 1.0
    pfull[idx, 2 * N + 2 * idx + 1] = 1.0

    # ChebConv: W_all = [W_0.T | ... | W_{K-1}.T]  ([H, K*H])
    w_cheb = np.zeros((H, K * H), np.float32)
    for k in range(K):
        w_cheb[:, k * H:(k + 1) * H] = raw["cheb_w"][k].T

    # bf16 weight / operator slab (lane width 384 = 3 * 128)
    wb = _SlabBuilder(lanes=384, row_align=16)
    wb.add("wi", wi_all)                               # [2, 120]
    wb.add("wh", wh_all)                               # [40, 120]
    wb.add("fc4", w4)                                  # [40, 80]
    wb.add("pfull", pfull)                             # [16, 64]
    wb.add("chebw", w_cheb)                            # [20, 300]
    wb.add("ts", ts)                                   # [16, 240]
    wb.add("anorm", anorm)                             # [16, 16]
    wb.add("gcnw", raw["gcn_w"].T)                     # [20, 20]
    wslab, woff = wb.build()

    # f32 bias slab (lane width 128)
    bb = _SlabBuilder(lanes=128, row_align=8)
    bb.add("bi", bi_all)                               # [1, 120]
    bb.add("bhn", bhn)                                 # [1, 40]
    bb.add("fcb", raw["fc_b"][None, :])                # [1, 20]
    bb.add("chebb", raw["cheb_b"][None, :])            # [1, 20]
    bb.add("gcnb", raw["gcn_b"][None, :])              # [1, 20]
    bslab, boff = bb.build()

    return (jnp.asarray(wslab, jnp.bfloat16), jnp.asarray(bslab, jnp.float32),
            woff, boff)


def init_params(key, edge_index, in_feat=2, H=HIDDEN_DIM, K=CHEB_K, N=16):
    keys = jax.random.split(key, 16)
    s = 0.1

    def nrm(k, shape):
        return np.asarray(s * jax.random.normal(k, shape), np.float32)

    raw = {}
    for i, d in enumerate(["f", "b"]):                 # torch-layout GRU params
        raw[f"wih_{d}"] = nrm(keys[4 * i + 0], (3 * H, in_feat))
        raw[f"whh_{d}"] = nrm(keys[4 * i + 1], (3 * H, H))
        raw[f"bih_{d}"] = nrm(keys[4 * i + 2], (3 * H,))
        raw[f"bhh_{d}"] = nrm(keys[4 * i + 3], (3 * H,))
    raw["fc_w"] = nrm(keys[8], (H, 2 * H))             # Linear [out, in]
    raw["fc_b"] = nrm(keys[9], (H,))
    raw["cheb_w"] = nrm(keys[10], (K, H, H))           # each [out, in]
    raw["cheb_b"] = nrm(keys[11], (H,))
    raw["gcn_w"] = nrm(keys[12], (H, H))
    raw["gcn_b"] = nrm(keys[13], (H,))

    ts = build_cheb_ts(edge_index, N, K)               # [N, K*N]
    anorm = build_gcn_anorm(edge_index, N)             # [N, N]
    return pack_params(raw, in_feat, H, K, N, ts, anorm)


# ----------------------------------------------------------------------------
if __name__ == "__main__":
    N = 16      # node_num
    T = 8       # sequence length
    B = 2       # batch of "data"
    F_IN = 2

    key = jax.random.PRNGKey(0)
    k_x, k_d, k_p = jax.random.split(key, 3)

    # graph_data.x : [N, T, 2]
    x = jax.random.normal(k_x, (N, T, F_IN), dtype=jnp.float32)

    # data : [B, T, 3] ; data[:, :, :2] are features, data[:, 0, 2] are node ids
    ids = jnp.array([3, 10], dtype=jnp.float32)
    data_feat = jax.random.normal(k_d, (B, T, 2), dtype=jnp.float32)
    data = jnp.concatenate(
        [data_feat, jnp.broadcast_to(ids[:, None, None], (B, T, 1))], axis=-1
    )

    # edge_index: bidirectional ring graph, shape [2, 2N]
    src = np.arange(N)
    dst = (src + 1) % N
    edge_index = np.stack(
        [np.concatenate([src, dst]), np.concatenate([dst, src])], axis=0
    ).astype(np.int64)

    wslab, bslab, woff, boff = init_params(k_p, edge_index, in_feat=F_IN,
                                           H=HIDDEN_DIM, K=CHEB_K, N=N)
    forward = build_gcnnet_forward(wslab, bslab, woff, boff,
                                   N=N, T=T, F=F_IN, H=HIDDEN_DIM, K=CHEB_K)

    out = forward(x, data)
    out = jax.block_until_ready(out)

    assert out.shape == (N, HIDDEN_DIM), out.shape
    assert bool(jnp.all(jnp.isfinite(out)))
    print("KERNEL_OK")
</pallas_src>

<mosaic_0001>
module attributes {stable_mosaic.version = 11 : i64} {
  func.func @kernel(%arg0: memref<128x2xf32, #tpu.memory_space<vmem>>, %arg1: memref<224x384xbf16, #tpu.memory_space<vmem>>, %arg2: memref<40x128xf32, #tpu.memory_space<vmem>>, %arg3: memref<16x20xf32, #tpu.memory_space<vmem>>) attributes {dimension_semantics = [], scalar_prefetch = 0 : i64, scratch_operands = 0 : i64, tpu.core_type = #tpu.core_type<tc>} {
    %c0 = arith.constant 0 : index
    %c0_0 = arith.constant 0 : index
    %0 = vector.load %arg0[%c0, %c0_0] : memref<128x2xf32, #tpu.memory_space<vmem>>, vector<128x2xf32>
    %1 = arith.truncf %0 : vector<128x2xf32> to vector<128x2xbf16>
    %c0_1 = arith.constant 0 : index
    %c0_2 = arith.constant 0 : index
    %2 = vector.load %arg1[%c0_1, %c0_2] : memref<224x384xbf16, #tpu.memory_space<vmem>>, vector<2x120xbf16>
    %cst = arith.constant dense<0.000000e+00> : vector<128x120xf32>
    %3 = tpu.matmul %1, %2, %cst {dimension_numbers = #tpu.dot_dimension_numbers<[1], [0], [0], [1], [0, 0, 1, 1], [], []>} : vector<128x2xbf16>, vector<2x120xbf16>, vector<128x120xf32> -> vector<128x120xf32>
    %c0_3 = arith.constant 0 : index
    %c0_4 = arith.constant 0 : index
    %4 = vector.load %arg2[%c0_3, %c0_4] : memref<40x128xf32, #tpu.memory_space<vmem>>, vector<1x120xf32>
    %5 = vector.broadcast %4 : vector<1x120xf32> to vector<128x120xf32>
    %6 = arith.addf %3, %5 : vector<128x120xf32>
    %c16 = arith.constant 16 : index
    %c0_5 = arith.constant 0 : index
    %7 = vector.load %arg1[%c16, %c0_5] : memref<224x384xbf16, #tpu.memory_space<vmem>>, vector<40x120xbf16>
    %c8 = arith.constant 8 : index
    %c0_6 = arith.constant 0 : index
    %8 = vector.load %arg2[%c8, %c0_6] : memref<40x128xf32, #tpu.memory_space<vmem>>, vector<1x40xf32>
    %9 = tpu.iota {dimensions = array<i32: 1>} : vector<16x120xi32>
    %c40_i32 = arith.constant 40 : i32
    %c0_i32 = arith.constant 0 : i32
    %10 = arith.cmpi eq, %c40_i32, %c0_i32 : i32
    %c1_i32 = arith.constant 1 : i32
    %11 = arith.select %10, %c1_i32, %c40_i32 : i32
    %12 = vector.broadcast %11 : i32 to vector<16x120xi32>
    %13 = arith.remsi %9, %12 : vector<16x120xi32>
    %c0_i32_7 = arith.constant 0 : i32
    %14 = vector.broadcast %c0_i32_7 : i32 to vector<16x120xi32>
    %15 = arith.cmpi ne, %13, %14 : vector<16x120xi32>
    %c0_i32_8 = arith.constant 0 : i32
    %16 = vector.broadcast %c0_i32_8 : i32 to vector<16x120xi32>
    %17 = arith.cmpi slt, %13, %16 : vector<16x120xi32>
    %c0_i32_9 = arith.constant 0 : i32
    %18 = arith.cmpi slt, %11, %c0_i32_9 : i32
    %19 = vector.broadcast %18 : i1 to vector<16x120xi1>
    %20 = vector.broadcast %19 : vector<16x120xi1> to vector<16x120xi1>
    %21 = arith.xori %17, %20 : vector<16x120xi1>
    %22 = arith.andi %21, %15 : vector<16x120xi1>
    %23 = vector.broadcast %11 : i32 to vector<16x120xi32>
    %24 = arith.addi %13, %23 : vector<16x120xi32>
    %25 = arith.select %22, %24, %13 : vector<16x120xi1>, vector<16x120xi32>
    %c20_i32 = arith.constant 20 : i32
    %26 = vector.broadcast %c20_i32 : i32 to vector<16x120xi32>
    %27 = arith.cmpi slt, %25, %26 : vector<16x120xi32>
    %cst_10 = arith.constant 0.000000e+00 : f32
    %28 = vector.broadcast %cst_10 : f32 to vector<16x40xf32>
    %29 = vector.extract_strided_slice %6 {offsets = [0, 0], sizes = [16, 120], strides = [1, 1]} : vector<128x120xf32> to vector<16x120xf32>
    %30 = vector.extract_strided_slice %6 {offsets = [112, 0], sizes = [16, 120], strides = [1, 1]} : vector<128x120xf32> to vector<16x120xf32>
    %31 = arith.select %27, %29, %30 : vector<16x120xi1>, vector<16x120xf32>
    %32 = arith.truncf %28 : vector<16x40xf32> to vector<16x40xbf16>
    %cst_11 = arith.constant dense<0.000000e+00> : vector<16x120xf32>
    %33 = tpu.matmul %32, %7, %cst_11 {dimension_numbers = #tpu.dot_dimension_numbers<[1], [0], [0], [1], [0, 0, 1, 1], [], []>} : vector<16x40xbf16>, vector<40x120xbf16>, vector<16x120xf32> -> vector<16x120xf32>
    %34 = vector.extract_strided_slice %31 {offsets = [0, 0], sizes = [16, 40], strides = [1, 1]} : vector<16x120xf32> to vector<16x40xf32>
    %35 = vector.extract_strided_slice %33 {offsets = [0, 0], sizes = [16, 40], strides = [1, 1]} : vector<16x120xf32> to vector<16x40xf32>
    %36 = arith.addf %34, %35 : vector<16x40xf32>
    %37 = arith.negf %36 : vector<16x40xf32>
    %38 = math.exp %37 : vector<16x40xf32>
    %cst_12 = arith.constant 1.000000e+00 : f32
    %39 = vector.broadcast %cst_12 : f32 to vector<16x40xf32>
    %40 = arith.addf %39, %38 : vector<16x40xf32>
    %41 = arith.divf %39, %40 : vector<16x40xf32>
    %42 = vector.extract_strided_slice %31 {offsets = [0, 40], sizes = [16, 40], strides = [1, 1]} : vector<16x120xf32> to vector<16x40xf32>
    %43 = vector.extract_strided_slice %33 {offsets = [0, 40], sizes = [16, 40], strides = [1, 1]} : vector<16x120xf32> to vector<16x40xf32>
    %44 = arith.addf %42, %43 : vector<16x40xf32>
    %45 = arith.negf %44 : vector<16x40xf32>
    %46 = math.exp %45 : vector<16x40xf32>
    %cst_13 = arith.constant 1.000000e+00 : f32
    %47 = vector.broadcast %cst_13 : f32 to vector<16x40xf32>
    %48 = arith.addf %47, %46 : vector<16x40xf32>
    %49 = arith.divf %47, %48 : vector<16x40xf32>
    %50 = vector.extract_strided_slice %31 {offsets = [0, 80], sizes = [16, 40], strides = [1, 1]} : vector<16x120xf32> to vector<16x40xf32>
    %51 = vector.extract_strided_slice %33 {offsets = [0, 80], sizes = [16, 40], strides = [1, 1]} : vector<16x120xf32> to vector<16x40xf32>
    %52 = vector.broadcast %8 : vector<1x40xf32> to vector<16x40xf32>
    %53 = arith.addf %51, %52 : vector<16x40xf32>
    %54 = arith.mulf %41, %53 : vector<16x40xf32>
    %55 = arith.addf %50, %54 : vector<16x40xf32>
    %56 = math.tanh %55 : vector<16x40xf32>
    %cst_14 = arith.constant 1.000000e+00 : f32
    %57 = vector.broadcast %cst_14 : f32 to vector<16x40xf32>
    %58 = arith.subf %57, %49 : vector<16x40xf32>
    %59 = arith.mulf %58, %56 : vector<16x40xf32>
    %60 = arith.mulf %49, %28 : vector<16x40xf32>
    %61 = arith.addf %59, %60 : vector<16x40xf32>
    %62 = vector.extract_strided_slice %6 {offsets = [16, 0], sizes = [16, 120], strides = [1, 1]} : vector<128x120xf32> to vector<16x120xf32>
    %63 = vector.extract_strided_slice %6 {offsets = [96, 0], sizes = [16, 120], strides = [1, 1]} : vector<128x120xf32> to vector<16x120xf32>
    %64 = arith.select %27, %62, %63 : vector<16x120xi1>, vector<16x120xf32>
    %65 = arith.truncf %61 : vector<16x40xf32> to vector<16x40xbf16>
    %cst_15 = arith.constant dense<0.000000e+00> : vector<16x120xf32>
    %66 = tpu.matmul %65, %7, %cst_15 {dimension_numbers = #tpu.dot_dimension_numbers<[1], [0], [0], [1], [0, 0, 1, 1], [], []>} : vector<16x40xbf16>, vector<40x120xbf16>, vector<16x120xf32> -> vector<16x120xf32>
    %67 = vector.extract_strided_slice %64 {offsets = [0, 0], sizes = [16, 40], strides = [1, 1]} : vector<16x120xf32> to vector<16x40xf32>
    %68 = vector.extract_strided_slice %66 {offsets = [0, 0], sizes = [16, 40], strides = [1, 1]} : vector<16x120xf32> to vector<16x40xf32>
    %69 = arith.addf %67, %68 : vector<16x40xf32>
    %70 = arith.negf %69 : vector<16x40xf32>
    %71 = math.exp %70 : vector<16x40xf32>
    %cst_16 = arith.constant 1.000000e+00 : f32
    %72 = vector.broadcast %cst_16 : f32 to vector<16x40xf32>
    %73 = arith.addf %72, %71 : vector<16x40xf32>
    %74 = arith.divf %72, %73 : vector<16x40xf32>
    %75 = vector.extract_strided_slice %64 {offsets = [0, 40], sizes = [16, 40], strides = [1, 1]} : vector<16x120xf32> to vector<16x40xf32>
    %76 = vector.extract_strided_slice %66 {offsets = [0, 40], sizes = [16, 40], strides = [1, 1]} : vector<16x120xf32> to vector<16x40xf32>
    %77 = arith.addf %75, %76 : vector<16x40xf32>
    %78 = arith.negf %77 : vector<16x40xf32>
    %79 = math.exp %78 : vector<16x40xf32>
    %cst_17 = arith.constant 1.000000e+00 : f32
    %80 = vector.broadcast %cst_17 : f32 to vector<16x40xf32>
    %81 = arith.addf %80, %79 : vector<16x40xf32>
    %82 = arith.divf %80, %81 : vector<16x40xf32>
    %83 = vector.extract_strided_slice %64 {offsets = [0, 80], sizes = [16, 40], strides = [1, 1]} : vector<16x120xf32> to vector<16x40xf32>
    %84 = vector.extract_strided_slice %66 {offsets = [0, 80], sizes = [16, 40], strides = [1, 1]} : vector<16x120xf32> to vector<16x40xf32>
    %85 = vector.broadcast %8 : vector<1x40xf32> to vector<16x40xf32>
    %86 = arith.addf %84, %85 : vector<16x40xf32>
    %87 = arith.mulf %74, %86 : vector<16x40xf32>
    %88 = arith.addf %83, %87 : vector<16x40xf32>
    %89 = math.tanh %88 : vector<16x40xf32>
    %cst_18 = arith.constant 1.000000e+00 : f32
    %90 = vector.broadcast %cst_18 : f32 to vector<16x40xf32>
    %91 = arith.subf %90, %82 : vector<16x40xf32>
    %92 = arith.mulf %91, %89 : vector<16x40xf32>
    %93 = arith.mulf %82, %61 : vector<16x40xf32>
    %94 = arith.addf %92, %93 : vector<16x40xf32>
    %95 = vector.extract_strided_slice %6 {offsets = [32, 0], sizes = [16, 120], strides = [1, 1]} : vector<128x120xf32> to vector<16x120xf32>
    %96 = vector.extract_strided_slice %6 {offsets = [80, 0], sizes = [16, 120], strides = [1, 1]} : vector<128x120xf32> to vector<16x120xf32>
    %97 = arith.select %27, %95, %96 : vector<16x120xi1>, vector<16x120xf32>
    %98 = arith.truncf %94 : vector<16x40xf32> to vector<16x40xbf16>
    %cst_19 = arith.constant dense<0.000000e+00> : vector<16x120xf32>
    %99 = tpu.matmul %98, %7, %cst_19 {dimension_numbers = #tpu.dot_dimension_numbers<[1], [0], [0], [1], [0, 0, 1, 1], [], []>} : vector<16x40xbf16>, vector<40x120xbf16>, vector<16x120xf32> -> vector<16x120xf32>
    %100 = vector.extract_strided_slice %97 {offsets = [0, 0], sizes = [16, 40], strides = [1, 1]} : vector<16x120xf32> to vector<16x40xf32>
    %101 = vector.extract_strided_slice %99 {offsets = [0, 0], sizes = [16, 40], strides = [1, 1]} : vector<16x120xf32> to vector<16x40xf32>
    %102 = arith.addf %100, %101 : vector<16x40xf32>
    %103 = arith.negf %102 : vector<16x40xf32>
    %104 = math.exp %103 : vector<16x40xf32>
    %cst_20 = arith.constant 1.000000e+00 : f32
    %105 = vector.broadcast %cst_20 : f32 to vector<16x40xf32>
    %106 = arith.addf %105, %104 : vector<16x40xf32>
    %107 = arith.divf %105, %106 : vector<16x40xf32>
    %108 = vector.extract_strided_slice %97 {offsets = [0, 40], sizes = [16, 40], strides = [1, 1]} : vector<16x120xf32> to vector<16x40xf32>
    %109 = vector.extract_strided_slice %99 {offsets = [0, 40], sizes = [16, 40], strides = [1, 1]} : vector<16x120xf32> to vector<16x40xf32>
    %110 = arith.addf %108, %109 : vector<16x40xf32>
    %111 = arith.negf %110 : vector<16x40xf32>
    %112 = math.exp %111 : vector<16x40xf32>
    %cst_21 = arith.constant 1.000000e+00 : f32
    %113 = vector.broadcast %cst_21 : f32 to vector<16x40xf32>
    %114 = arith.addf %113, %112 : vector<16x40xf32>
    %115 = arith.divf %113, %114 : vector<16x40xf32>
    %116 = vector.extract_strided_slice %97 {offsets = [0, 80], sizes = [16, 40], strides = [1, 1]} : vector<16x120xf32> to vector<16x40xf32>
    %117 = vector.extract_strided_slice %99 {offsets = [0, 80], sizes = [16, 40], strides = [1, 1]} : vector<16x120xf32> to vector<16x40xf32>
    %118 = vector.broadcast %8 : vector<1x40xf32> to vector<16x40xf32>
    %119 = arith.addf %117, %118 : vector<16x40xf32>
    %120 = arith.mulf %107, %119 : vector<16x40xf32>
    %121 = arith.addf %116, %120 : vector<16x40xf32>
    %122 = math.tanh %121 : vector<16x40xf32>
    %cst_22 = arith.constant 1.000000e+00 : f32
    %123 = vector.broadcast %cst_22 : f32 to vector<16x40xf32>
    %124 = arith.subf %123, %115 : vector<16x40xf32>
    %125 = arith.mulf %124, %122 : vector<16x40xf32>
    %126 = arith.mulf %115, %94 : vector<16x40xf32>
    %127 = arith.addf %125, %126 : vector<16x40xf32>
    %128 = vector.extract_strided_slice %6 {offsets = [48, 0], sizes = [16, 120], strides = [1, 1]} : vector<128x120xf32> to vector<16x120xf32>
    %129 = vector.extract_strided_slice %6 {offsets = [64, 0], sizes = [16, 120], strides = [1, 1]} : vector<128x120xf32> to vector<16x120xf32>
    %130 = arith.select %27, %128, %129 : vector<16x120xi1>, vector<16x120xf32>
    %131 = arith.truncf %127 : vector<16x40xf32> to vector<16x40xbf16>
    %cst_23 = arith.constant dense<0.000000e+00> : vector<16x120xf32>
    %132 = tpu.matmul %131, %7, %cst_23 {dimension_numbers = #tpu.dot_dimension_numbers<[1], [0], [0], [1], [0, 0, 1, 1], [], []>} : vector<16x40xbf16>, vector<40x120xbf16>, vector<16x120xf32> -> vector<16x120xf32>
    %133 = vector.extract_strided_slice %130 {offsets = [0, 0], sizes = [16, 40], strides = [1, 1]} : vector<16x120xf32> to vector<16x40xf32>
    %134 = vector.extract_strided_slice %132 {offsets = [0, 0], sizes = [16, 40], strides = [1, 1]} : vector<16x120xf32> to vector<16x40xf32>
    %135 = arith.addf %133, %134 : vector<16x40xf32>
    %136 = arith.negf %135 : vector<16x40xf32>
    %137 = math.exp %136 : vector<16x40xf32>
    %cst_24 = arith.constant 1.000000e+00 : f32
    %138 = vector.broadcast %cst_24 : f32 to vector<16x40xf32>
    %139 = arith.addf %138, %137 : vector<16x40xf32>
    %140 = arith.divf %138, %139 : vector<16x40xf32>
    %141 = vector.extract_strided_slice %130 {offsets = [0, 40], sizes = [16, 40], strides = [1, 1]} : vector<16x120xf32> to vector<16x40xf32>
    %142 = vector.extract_strided_slice %132 {offsets = [0, 40], sizes = [16, 40], strides = [1, 1]} : vector<16x120xf32> to vector<16x40xf32>
    %143 = arith.addf %141, %142 : vector<16x40xf32>
    %144 = arith.negf %143 : vector<16x40xf32>
    %145 = math.exp %144 : vector<16x40xf32>
    %cst_25 = arith.constant 1.000000e+00 : f32
    %146 = vector.broadcast %cst_25 : f32 to vector<16x40xf32>
    %147 = arith.addf %146, %145 : vector<16x40xf32>
    %148 = arith.divf %146, %147 : vector<16x40xf32>
    %149 = vector.extract_strided_slice %130 {offsets = [0, 80], sizes = [16, 40], strides = [1, 1]} : vector<16x120xf32> to vector<16x40xf32>
    %150 = vector.extract_strided_slice %132 {offsets = [0, 80], sizes = [16, 40], strides = [1, 1]} : vector<16x120xf32> to vector<16x40xf32>
    %151 = vector.broadcast %8 : vector<1x40xf32> to vector<16x40xf32>
    %152 = arith.addf %150, %151 : vector<16x40xf32>
    %153 = arith.mulf %140, %152 : vector<16x40xf32>
    %154 = arith.addf %149, %153 : vector<16x40xf32>
    %155 = math.tanh %154 : vector<16x40xf32>
    %cst_26 = arith.constant 1.000000e+00 : f32
    %156 = vector.broadcast %cst_26 : f32 to vector<16x40xf32>
    %157 = arith.subf %156, %148 : vector<16x40xf32>
    %158 = arith.mulf %157, %155 : vector<16x40xf32>
    %159 = arith.mulf %148, %127 : vector<16x40xf32>
    %160 = arith.addf %158, %159 : vector<16x40xf32>
    %161 = vector.extract_strided_slice %6 {offsets = [64, 0], sizes = [16, 120], strides = [1, 1]} : vector<128x120xf32> to vector<16x120xf32>
    %162 = vector.extract_strided_slice %6 {offsets = [48, 0], sizes = [16, 120], strides = [1, 1]} : vector<128x120xf32> to vector<16x120xf32>
    %163 = arith.select %27, %161, %162 : vector<16x120xi1>, vector<16x120xf32>
    %164 = arith.truncf %160 : vector<16x40xf32> to vector<16x40xbf16>
    %cst_27 = arith.constant dense<0.000000e+00> : vector<16x120xf32>
    %165 = tpu.matmul %164, %7, %cst_27 {dimension_numbers = #tpu.dot_dimension_numbers<[1], [0], [0], [1], [0, 0, 1, 1], [], []>} : vector<16x40xbf16>, vector<40x120xbf16>, vector<16x120xf32> -> vector<16x120xf32>
    %166 = vector.extract_strided_slice %163 {offsets = [0, 0], sizes = [16, 40], strides = [1, 1]} : vector<16x120xf32> to vector<16x40xf32>
    %167 = vector.extract_strided_slice %165 {offsets = [0, 0], sizes = [16, 40], strides = [1, 1]} : vector<16x120xf32> to vector<16x40xf32>
    %168 = arith.addf %166, %167 : vector<16x40xf32>
    %169 = arith.negf %168 : vector<16x40xf32>
    %170 = math.exp %169 : vector<16x40xf32>
    %cst_28 = arith.constant 1.000000e+00 : f32
    %171 = vector.broadcast %cst_28 : f32 to vector<16x40xf32>
    %172 = arith.addf %171, %170 : vector<16x40xf32>
    %173 = arith.divf %171, %172 : vector<16x40xf32>
    %174 = vector.extract_strided_slice %163 {offsets = [0, 40], sizes = [16, 40], strides = [1, 1]} : vector<16x120xf32> to vector<16x40xf32>
    %175 = vector.extract_strided_slice %165 {offsets = [0, 40], sizes = [16, 40], strides = [1, 1]} : vector<16x120xf32> to vector<16x40xf32>
    %176 = arith.addf %174, %175 : vector<16x40xf32>
    %177 = arith.negf %176 : vector<16x40xf32>
    %178 = math.exp %177 : vector<16x40xf32>
    %cst_29 = arith.constant 1.000000e+00 : f32
    %179 = vector.broadcast %cst_29 : f32 to vector<16x40xf32>
    %180 = arith.addf %179, %178 : vector<16x40xf32>
    %181 = arith.divf %179, %180 : vector<16x40xf32>
    %182 = vector.extract_strided_slice %163 {offsets = [0, 80], sizes = [16, 40], strides = [1, 1]} : vector<16x120xf32> to vector<16x40xf32>
    %183 = vector.extract_strided_slice %165 {offsets = [0, 80], sizes = [16, 40], strides = [1, 1]} : vector<16x120xf32> to vector<16x40xf32>
    %184 = vector.broadcast %8 : vector<1x40xf32> to vector<16x40xf32>
    %185 = arith.addf %183, %184 : vector<16x40xf32>
    %186 = arith.mulf %173, %185 : vector<16x40xf32>
    %187 = arith.addf %182, %186 : vector<16x40xf32>
    %188 = math.tanh %187 : vector<16x40xf32>
    %cst_30 = arith.constant 1.000000e+00 : f32
    %189 = vector.broadcast %cst_30 : f32 to vector<16x40xf32>
    %190 = arith.subf %189, %181 : vector<16x40xf32>
    %191 = arith.mulf %190, %188 : vector<16x40xf32>
    %192 = arith.mulf %181, %160 : vector<16x40xf32>
    %193 = arith.addf %191, %192 : vector<16x40xf32>
    %194 = vector.extract_strided_slice %6 {offsets = [80, 0], sizes = [16, 120], strides = [1, 1]} : vector<128x120xf32> to vector<16x120xf32>
    %195 = vector.extract_strided_slice %6 {offsets = [32, 0], sizes = [16, 120], strides = [1, 1]} : vector<128x120xf32> to vector<16x120xf32>
    %196 = arith.select %27, %194, %195 : vector<16x120xi1>, vector<16x120xf32>
    %197 = arith.truncf %193 : vector<16x40xf32> to vector<16x40xbf16>
    %cst_31 = arith.constant dense<0.000000e+00> : vector<16x120xf32>
    %198 = tpu.matmul %197, %7, %cst_31 {dimension_numbers = #tpu.dot_dimension_numbers<[1], [0], [0], [1], [0, 0, 1, 1], [], []>} : vector<16x40xbf16>, vector<40x120xbf16>, vector<16x120xf32> -> vector<16x120xf32>
    %199 = vector.extract_strided_slice %196 {offsets = [0, 0], sizes = [16, 40], strides = [1, 1]} : vector<16x120xf32> to vector<16x40xf32>
    %200 = vector.extract_strided_slice %198 {offsets = [0, 0], sizes = [16, 40], strides = [1, 1]} : vector<16x120xf32> to vector<16x40xf32>
    %201 = arith.addf %199, %200 : vector<16x40xf32>
    %202 = arith.negf %201 : vector<16x40xf32>
    %203 = math.exp %202 : vector<16x40xf32>
    %cst_32 = arith.constant 1.000000e+00 : f32
    %204 = vector.broadcast %cst_32 : f32 to vector<16x40xf32>
    %205 = arith.addf %204, %203 : vector<16x40xf32>
    %206 = arith.divf %204, %205 : vector<16x40xf32>
    %207 = vector.extract_strided_slice %196 {offsets = [0, 40], sizes = [16, 40], strides = [1, 1]} : vector<16x120xf32> to vector<16x40xf32>
    %208 = vector.extract_strided_slice %198 {offsets = [0, 40], sizes = [16, 40], strides = [1, 1]} : vector<16x120xf32> to vector<16x40xf32>
    %209 = arith.addf %207, %208 : vector<16x40xf32>
    %210 = arith.negf %209 : vector<16x40xf32>
    %211 = math.exp %210 : vector<16x40xf32>
    %cst_33 = arith.constant 1.000000e+00 : f32
    %212 = vector.broadcast %cst_33 : f32 to vector<16x40xf32>
    %213 = arith.addf %212, %211 : vector<16x40xf32>
    %214 = arith.divf %212, %213 : vector<16x40xf32>
    %215 = vector.extract_strided_slice %196 {offsets = [0, 80], sizes = [16, 40], strides = [1, 1]} : vector<16x120xf32> to vector<16x40xf32>
    %216 = vector.extract_strided_slice %198 {offsets = [0, 80], sizes = [16, 40], strides = [1, 1]} : vector<16x120xf32> to vector<16x40xf32>
    %217 = vector.broadcast %8 : vector<1x40xf32> to vector<16x40xf32>
    %218 = arith.addf %216, %217 : vector<16x40xf32>
    %219 = arith.mulf %206, %218 : vector<16x40xf32>
    %220 = arith.addf %215, %219 : vector<16x40xf32>
    %221 = math.tanh %220 : vector<16x40xf32>
    %cst_34 = arith.constant 1.000000e+00 : f32
    %222 = vector.broadcast %cst_34 : f32 to vector<16x40xf32>
    %223 = arith.subf %222, %214 : vector<16x40xf32>
    %224 = arith.mulf %223, %221 : vector<16x40xf32>
    %225 = arith.mulf %214, %193 : vector<16x40xf32>
    %226 = arith.addf %224, %225 : vector<16x40xf32>
    %227 = vector.extract_strided_slice %6 {offsets = [96, 0], sizes = [16, 120], strides = [1, 1]} : vector<128x120xf32> to vector<16x120xf32>
    %228 = vector.extract_strided_slice %6 {offsets = [16, 0], sizes = [16, 120], strides = [1, 1]} : vector<128x120xf32> to vector<16x120xf32>
    %229 = arith.select %27, %227, %228 : vector<16x120xi1>, vector<16x120xf32>
    %230 = arith.truncf %226 : vector<16x40xf32> to vector<16x40xbf16>
    %cst_35 = arith.constant dense<0.000000e+00> : vector<16x120xf32>
    %231 = tpu.matmul %230, %7, %cst_35 {dimension_numbers = #tpu.dot_dimension_numbers<[1], [0], [0], [1], [0, 0, 1, 1], [], []>} : vector<16x40xbf16>, vector<40x120xbf16>, vector<16x120xf32> -> vector<16x120xf32>
    %232 = vector.extract_strided_slice %229 {offsets = [0, 0], sizes = [16, 40], strides = [1, 1]} : vector<16x120xf32> to vector<16x40xf32>
    %233 = vector.extract_strided_slice %231 {offsets = [0, 0], sizes = [16, 40], strides = [1, 1]} : vector<16x120xf32> to vector<16x40xf32>
    %234 = arith.addf %232, %233 : vector<16x40xf32>
    %235 = arith.negf %234 : vector<16x40xf32>
    %236 = math.exp %235 : vector<16x40xf32>
    %cst_36 = arith.constant 1.000000e+00 : f32
    %237 = vector.broadcast %cst_36 : f32 to vector<16x40xf32>
    %238 = arith.addf %237, %236 : vector<16x40xf32>
    %239 = arith.divf %237, %238 : vector<16x40xf32>
    %240 = vector.extract_strided_slice %229 {offsets = [0, 40], sizes = [16, 40], strides = [1, 1]} : vector<16x120xf32> to vector<16x40xf32>
    %241 = vector.extract_strided_slice %231 {offsets = [0, 40], sizes = [16, 40], strides = [1, 1]} : vector<16x120xf32> to vector<16x40xf32>
    %242 = arith.addf %240, %241 : vector<16x40xf32>
    %243 = arith.negf %242 : vector<16x40xf32>
    %244 = math.exp %243 : vector<16x40xf32>
    %cst_37 = arith.constant 1.000000e+00 : f32
    %245 = vector.broadcast %cst_37 : f32 to vector<16x40xf32>
    %246 = arith.addf %245, %244 : vector<16x40xf32>
    %247 = arith.divf %245, %246 : vector<16x40xf32>
    %248 = vector.extract_strided_slice %229 {offsets = [0, 80], sizes = [16, 40], strides = [1, 1]} : vector<16x120xf32> to vector<16x40xf32>
    %249 = vector.extract_strided_slice %231 {offsets = [0, 80], sizes = [16, 40], strides = [1, 1]} : vector<16x120xf32> to vector<16x40xf32>
    %250 = vector.broadcast %8 : vector<1x40xf32> to vector<16x40xf32>
    %251 = arith.addf %249, %250 : vector<16x40xf32>
    %252 = arith.mulf %239, %251 : vector<16x40xf32>
    %253 = arith.addf %248, %252 : vector<16x40xf32>
    %254 = math.tanh %253 : vector<16x40xf32>
    %cst_38 = arith.constant 1.000000e+00 : f32
    %255 = vector.broadcast %cst_38 : f32 to vector<16x40xf32>
    %256 = arith.subf %255, %247 : vector<16x40xf32>
    %257 = arith.mulf %256, %254 : vector<16x40xf32>
    %258 = arith.mulf %247, %226 : vector<16x40xf32>
    %259 = arith.addf %257, %258 : vector<16x40xf32>
    %260 = vector.extract_strided_slice %6 {offsets = [112, 0], sizes = [16, 120], strides = [1, 1]} : vector<128x120xf32> to vector<16x120xf32>
    %261 = vector.extract_strided_slice %6 {offsets = [0, 0], sizes = [16, 120], strides = [1, 1]} : vector<128x120xf32> to vector<16x120xf32>
    %262 = arith.select %27, %260, %261 : vector<16x120xi1>, vector<16x120xf32>
    %263 = arith.truncf %259 : vector<16x40xf32> to vector<16x40xbf16>
    %cst_39 = arith.constant dense<0.000000e+00> : vector<16x120xf32>
    %264 = tpu.matmul %263, %7, %cst_39 {dimension_numbers = #tpu.dot_dimension_numbers<[1], [0], [0], [1], [0, 0, 1, 1], [], []>} : vector<16x40xbf16>, vector<40x120xbf16>, vector<16x120xf32> -> vector<16x120xf32>
    %265 = vector.extract_strided_slice %262 {offsets = [0, 0], sizes = [16, 40], strides = [1, 1]} : vector<16x120xf32> to vector<16x40xf32>
    %266 = vector.extract_strided_slice %264 {offsets = [0, 0], sizes = [16, 40], strides = [1, 1]} : vector<16x120xf32> to vector<16x40xf32>
    %267 = arith.addf %265, %266 : vector<16x40xf32>
    %268 = arith.negf %267 : vector<16x40xf32>
    %269 = math.exp %268 : vector<16x40xf32>
    %cst_40 = arith.constant 1.000000e+00 : f32
    %270 = vector.broadcast %cst_40 : f32 to vector<16x40xf32>
    %271 = arith.addf %270, %269 : vector<16x40xf32>
    %272 = arith.divf %270, %271 : vector<16x40xf32>
    %273 = vector.extract_strided_slice %262 {offsets = [0, 40], sizes = [16, 40], strides = [1, 1]} : vector<16x120xf32> to vector<16x40xf32>
    %274 = vector.extract_strided_slice %264 {offsets = [0, 40], sizes = [16, 40], strides = [1, 1]} : vector<16x120xf32> to vector<16x40xf32>
    %275 = arith.addf %273, %274 : vector<16x40xf32>
    %276 = arith.negf %275 : vector<16x40xf32>
    %277 = math.exp %276 : vector<16x40xf32>
    %cst_41 = arith.constant 1.000000e+00 : f32
    %278 = vector.broadcast %cst_41 : f32 to vector<16x40xf32>
    %279 = arith.addf %278, %277 : vector<16x40xf32>
    %280 = arith.divf %278, %279 : vector<16x40xf32>
    %281 = vector.extract_strided_slice %262 {offsets = [0, 80], sizes = [16, 40], strides = [1, 1]} : vector<16x120xf32> to vector<16x40xf32>
    %282 = vector.extract_strided_slice %264 {offsets = [0, 80], sizes = [16, 40], strides = [1, 1]} : vector<16x120xf32> to vector<16x40xf32>
    %283 = vector.broadcast %8 : vector<1x40xf32> to vector<16x40xf32>
    %284 = arith.addf %282, %283 : vector<16x40xf32>
    %285 = arith.mulf %272, %284 : vector<16x40xf32>
    %286 = arith.addf %281, %285 : vector<16x40xf32>
    %287 = math.tanh %286 : vector<16x40xf32>
    %cst_42 = arith.constant 1.000000e+00 : f32
    %288 = vector.broadcast %cst_42 : f32 to vector<16x40xf32>
    %289 = arith.subf %288, %280 : vector<16x40xf32>
    %290 = arith.mulf %289, %287 : vector<16x40xf32>
    %291 = arith.mulf %280, %259 : vector<16x40xf32>
    %292 = arith.addf %290, %291 : vector<16x40xf32>
    %293 = arith.truncf %292 : vector<16x40xf32> to vector<16x40xbf16>
    %c64 = arith.constant 64 : index
    %c0_43 = arith.constant 0 : index
    %294 = vector.load %arg1[%c64, %c0_43] : memref<224x384xbf16, #tpu.memory_space<vmem>>, vector<40x80xbf16>
    %cst_44 = arith.constant dense<0.000000e+00> : vector<16x80xf32>
    %295 = tpu.matmul %293, %294, %cst_44 {dimension_numbers = #tpu.dot_dimension_numbers<[1], [0], [0], [1], [0, 0, 1, 1], [], []>} : vector<16x40xbf16>, vector<40x80xbf16>, vector<16x80xf32> -> vector<16x80xf32>
    %296 = arith.truncf %295 : vector<16x80xf32> to vector<16x80xbf16>
    %297 = vector.extract_strided_slice %296 {offsets = [0, 0], sizes = [16, 20], strides = [1, 1]} : vector<16x80xbf16> to vector<16x20xbf16>
    %298 = vector.extract_strided_slice %296 {offsets = [0, 20], sizes = [16, 20], strides = [1, 1]} : vector<16x80xbf16> to vector<16x20xbf16>
    %299 = vector.extract_strided_slice %296 {offsets = [0, 40], sizes = [16, 20], strides = [1, 1]} : vector<16x80xbf16> to vector<16x20xbf16>
    %300 = vector.extract_strided_slice %296 {offsets = [0, 60], sizes = [16, 20], strides = [1, 1]} : vector<16x80xbf16> to vector<16x20xbf16>
    %301 = tpu.concatenate %297, %298, %299, %300 in 0 : vector<16x20xbf16>, vector<16x20xbf16>, vector<16x20xbf16>, vector<16x20xbf16> -> vector<64x20xbf16>
    %c112 = arith.constant 112 : index
    %c0_45 = arith.constant 0 : index
    %302 = vector.load %arg1[%c112, %c0_45] : memref<224x384xbf16, #tpu.memory_space<vmem>>, vector<16x64xbf16>
    %cst_46 = arith.constant dense<0.000000e+00> : vector<16x20xf32>
    %303 = tpu.matmul %302, %301, %cst_46 {dimension_numbers = #tpu.dot_dimension_numbers<[1], [0], [0], [1], [0, 0, 1, 1], [], []>} : vector<16x64xbf16>, vector<64x20xbf16>, vector<16x20xf32> -> vector<16x20xf32>
    %c16_47 = arith.constant 16 : index
    %c0_48 = arith.constant 0 : index
    %304 = vector.load %arg2[%c16_47, %c0_48] : memref<40x128xf32, #tpu.memory_space<vmem>>, vector<1x20xf32>
    %305 = vector.broadcast %304 : vector<1x20xf32> to vector<16x20xf32>
    %306 = arith.addf %303, %305 : vector<16x20xf32>
    %307 = arith.truncf %306 : vector<16x20xf32> to vector<16x20xbf16>
    %c128 = arith.constant 128 : index
    %c0_49 = arith.constant 0 : index
    %308 = vector.load %arg1[%c128, %c0_49] : memref<224x384xbf16, #tpu.memory_space<vmem>>, vector<20x300xbf16>
    %cst_50 = arith.constant dense<0.000000e+00> : vector<16x300xf32>
    %309 = tpu.matmul %307, %308, %cst_50 {dimension_numbers = #tpu.dot_dimension_numbers<[1], [0], [0], [1], [0, 0, 1, 1], [], []>} : vector<16x20xbf16>, vector<20x300xbf16>, vector<16x300xf32> -> vector<16x300xf32>
    %310 = arith.truncf %309 : vector<16x300xf32> to vector<16x300xbf16>
    %311 = vector.extract_strided_slice %310 {offsets = [0, 0], sizes = [16, 20], strides = [1, 1]} : vector<16x300xbf16> to vector<16x20xbf16>
    %312 = vector.extract_strided_slice %310 {offsets = [0, 20], sizes = [16, 20], strides = [1, 1]} : vector<16x300xbf16> to vector<16x20xbf16>
    %313 = vector.extract_strided_slice %310 {offsets = [0, 40], sizes = [16, 20], strides = [1, 1]} : vector<16x300xbf16> to vector<16x20xbf16>
    %314 = vector.extract_strided_slice %310 {offsets = [0, 60], sizes = [16, 20], strides = [1, 1]} : vector<16x300xbf16> to vector<16x20xbf16>
    %315 = vector.extract_strided_slice %310 {offsets = [0, 80], sizes = [16, 20], strides = [1, 1]} : vector<16x300xbf16> to vector<16x20xbf16>
    %316 = vector.extract_strided_slice %310 {offsets = [0, 100], sizes = [16, 20], strides = [1, 1]} : vector<16x300xbf16> to vector<16x20xbf16>
    %317 = vector.extract_strided_slice %310 {offsets = [0, 120], sizes = [16, 20], strides = [1, 1]} : vector<16x300xbf16> to vector<16x20xbf16>
    %318 = vector.extract_strided_slice %310 {offsets = [0, 140], sizes = [16, 20], strides = [1, 1]} : vector<16x300xbf16> to vector<16x20xbf16>
    %319 = vector.extract_strided_slice %310 {offsets = [0, 160], sizes = [16, 20], strides = [1, 1]} : vector<16x300xbf16> to vector<16x20xbf16>
    %320 = vector.extract_strided_slice %310 {offsets = [0, 180], sizes = [16, 20], strides = [1, 1]} : vector<16x300xbf16> to vector<16x20xbf16>
    %321 = vector.extract_strided_slice %310 {offsets = [0, 200], sizes = [16, 20], strides = [1, 1]} : vector<16x300xbf16> to vector<16x20xbf16>
    %322 = vector.extract_strided_slice %310 {offsets = [0, 220], sizes = [16, 20], strides = [1, 1]} : vector<16x300xbf16> to vector<16x20xbf16>
    %323 = vector.extract_strided_slice %310 {offsets = [0, 240], sizes = [16, 20], strides = [1, 1]} : vector<16x300xbf16> to vector<16x20xbf16>
    %324 = vector.extract_strided_slice %310 {offsets = [0, 260], sizes = [16, 20], strides = [1, 1]} : vector<16x300xbf16> to vector<16x20xbf16>
    %325 = vector.extract_strided_slice %310 {offsets = [0, 280], sizes = [16, 20], strides = [1, 1]} : vector<16x300xbf16> to vector<16x20xbf16>
    %326 = tpu.concatenate %311, %312, %313, %314, %315, %316, %317, %318, %319, %320, %321, %322, %323, %324, %325 in 0 : vector<16x20xbf16>, vector<16x20xbf16>, vector<16x20xbf16>, vector<16x20xbf16>, vector<16x20xbf16>, vector<16x20xbf16>, vector<16x20xbf16>, vector<16x20xbf16>, vector<16x20xbf16>, vector<16x20xbf16>, vector<16x20xbf16>, vector<16x20xbf16>, vector<16x20xbf16>, vector<16x20xbf16>, vector<16x20xbf16> -> vector<240x20xbf16>
    %c160 = arith.constant 160 : index
    %c0_51 = arith.constant 0 : index
    %327 = vector.load %arg1[%c160, %c0_51] : memref<224x384xbf16, #tpu.memory_space<vmem>>, vector<16x240xbf16>
    %cst_52 = arith.constant dense<0.000000e+00> : vector<16x20xf32>
    %328 = tpu.matmul %327, %326, %cst_52 {dimension_numbers = #tpu.dot_dimension_numbers<[1], [0], [0], [1], [0, 0, 1, 1], [], []>} : vector<16x240xbf16>, vector<240x20xbf16>, vector<16x20xf32> -> vector<16x20xf32>
    %c24 = arith.constant 24 : index
    %c0_53 = arith.constant 0 : index
    %329 = vector.load %arg2[%c24, %c0_53] : memref<40x128xf32, #tpu.memory_space<vmem>>, vector<1x20xf32>
    %330 = vector.broadcast %329 : vector<1x20xf32> to vector<16x20xf32>
    %331 = arith.addf %328, %330 : vector<16x20xf32>
    %cst_54 = arith.constant 0.000000e+00 : f32
    %332 = vector.broadcast %cst_54 : f32 to vector<16x20xf32>
    %333 = arith.maximumf %331, %332 : vector<16x20xf32>
    %334 = arith.truncf %333 : vector<16x20xf32> to vector<16x20xbf16>
    %c192 = arith.constant 192 : index
    %c0_55 = arith.constant 0 : index
    %335 = vector.load %arg1[%c192, %c0_55] : memref<224x384xbf16, #tpu.memory_space<vmem>>, vector<20x20xbf16>
    %cst_56 = arith.constant dense<0.000000e+00> : vector<16x20xf32>
    %336 = tpu.matmul %334, %335, %cst_56 {dimension_numbers = #tpu.dot_dimension_numbers<[1], [0], [0], [1], [0, 0, 1, 1], [], []>} : vector<16x20xbf16>, vector<20x20xbf16>, vector<16x20xf32> -> vector<16x20xf32>
    %c176 = arith.constant 176 : index
    %c0_57 = arith.constant 0 : index
    %337 = vector.load %arg1[%c176, %c0_57] : memref<224x384xbf16, #tpu.memory_space<vmem>>, vector<16x16xbf16>
    %338 = arith.truncf %336 : vector<16x20xf32> to vector<16x20xbf16>
    %cst_58 = arith.constant dense<0.000000e+00> : vector<16x20xf32>
    %339 = tpu.matmul %337, %338, %cst_58 {dimension_numbers = #tpu.dot_dimension_numbers<[1], [0], [0], [1], [0, 0, 1, 1], [], []>} : vector<16x16xbf16>, vector<16x20xbf16>, vector<16x20xf32> -> vector<16x20xf32>
    %c32 = arith.constant 32 : index
    %c0_59 = arith.constant 0 : index
    %340 = vector.load %arg2[%c32, %c0_59] : memref<40x128xf32, #tpu.memory_space<vmem>>, vector<1x20xf32>
    %341 = vector.broadcast %340 : vector<1x20xf32> to vector<16x20xf32>
    %342 = arith.addf %339, %341 : vector<16x20xf32>
    %c0_60 = arith.constant 0 : index
    %c0_61 = arith.constant 0 : index
    %343 = vector.load %arg3[%c0_60, %c0_61] : memref<16x20xf32, #tpu.memory_space<vmem>>, vector<16x20xf32>
    tpu.vector_store %arg3[%c0_60, %c0_61], %342 {strides = array<i32>} : memref<16x20xf32, #tpu.memory_space<vmem>>, vector<16x20xf32>,
    return
  }
}

</mosaic_0001>

<llo_original>
// kernel: _fwd.1
$region0: #{_fwd.1}
  #allocation0 [shape = 'u32[]', space=smem, size = 0x4, offset = 0x4, fixed_abs, tag = 'smem constant byte address 0x4 - core index']
  #allocation1 [shape = 'u32[72,128]{1,0:T(1,128)}', space=vmem, size = 0x9000, scoped, tag = 'internal scratch']
  %s0 = inlined_call_operand.vmem [shape: f32[128,2], index: 0, kind: input, shape index: {}]
  %s1 = inlined_call_operand.vmem [shape: bf16[224,384], index: 1, kind: input, shape index: {}]
  %s2 = inlined_call_operand.hbm [shape: f32[40,128], index: 2, kind: input, shape index: {}]
  %s3 = inlined_call_operand.hbm [shape: f32[16,20], index: 3, kind: output, shape index: {}]
  %s4 = sld [smem:[#allocation0]]
  $region26: #{_fwd.1} parent=0
    _
  %s6 = ssub.s32 1, %s4
  %s7 = scalar_select 0, %s6, %s4
  $region1: #{_fwd.1} parent=0
    #allocation2 [shape = 'u8[20480]{0}', space=vmem, size = 0x5000, scoped, tag = 'input window, operand 2, single buffered']
    #allocation3 [shape = 's32[1]{0}', space=sflag, size = 0x4, scoped, tag = 'scoped memory for _fwd.1']
    #allocation4 [shape = 's32[1]{0}', space=sflag, size = 0x4, scoped, tag = 'scoped memory for _fwd.1']
    #allocation5 [shape = 'u8[8192]{0}', space=vmem, size = 0x2000, scoped, tag = 'output window, operand 0, single buffered']
    %8 = vsyncpa [#allocation3], 0
    %9 = vsyncpa [#allocation4], 0
    // Predicated region
    $region2: #{_fwd.1} parent=1 // pred_check
      _
    $region3: #{_fwd.1} parent=1 // pred_check_branch
      %11 = sbr.rel (0) target = $region5
    $region4: #{_fwd.1} parent=1 // pred_region
      _
    $region5: #{_fwd.1} parent=1 // pred_fallthru
      _
    // Predicated region
    $region6: #{_fwd.1} parent=1 // pred_check
      _
    $region7: #{_fwd.1} parent=1 // pred_check_branch
      %13 = sbr.rel (0) target = $region9
    $region8: #{_fwd.1} parent=1 // pred_region
      _
    $region9: #{_fwd.1} parent=1 // pred_fallthru
      _
    // Predicated region
    $region10: #{_fwd.1} parent=1 // pred_check
      _
    $region11: #{_fwd.1} parent=1 // pred_check_branch
      %15 = sbr.rel (0) target = $region13
    $region12: #{_fwd.1} parent=1 // pred_region
      %17 = vsyncadd [#allocation3], 0
      %s18 = sshll.u32 %s2, 4
      %s19 = int_to_ptr.hbm [resolvable:$true] %s18
      %s20 = sshll.u32 [#allocation2], 4
      %s21 = int_to_ptr.vmem [resolvable:$true] %s20
      %26 = dma.hbm_to_vmem [thread:$0]  %s19, 640, %s21, [#allocation3], 128, 128, 8
    $region13: #{_fwd.1} parent=1 // pred_fallthru
      _
    // Predicated region
    $region14: #{_fwd.1} parent=1 // pred_check
      _
    $region15: #{_fwd.1} parent=1 // pred_check_branch
      %28 = sbr.rel (0) target = $region17
    $region16: #{_fwd.1} parent=1 // pred_region
      %30 = dma.done [#allocation3], 640
    $region17: #{_fwd.1} parent=1 // pred_fallthru
      _
    %v32 = vld [vmem:[%s0] sm:$0xff]
    %v33 = vld [vmem:[%s0 + $0x8] sm:$0xff]
    %v34 = vld [vmem:[%s0 + $0x10] sm:$0xff]
    %v35 = vld [vmem:[%s0 + $0x18] sm:$0xff]
    %v36 = vld [vmem:[%s0 + $0x20] sm:$0xff]
    %v37 = vld [vmem:[%s0 + $0x28] sm:$0xff]
    %v38 = vld [vmem:[%s0 + $0x30] sm:$0xff]
    %v39 = vld [vmem:[%s0 + $0x38] sm:$0xff]
    %v40 = vld [vmem:[%s0 + $0x40] sm:$0xff]
    %v41 = vld [vmem:[%s0 + $0x48] sm:$0xff]
    %v42 = vld [vmem:[%s0 + $0x50] sm:$0xff]
    %v43 = vld [vmem:[%s0 + $0x58] sm:$0xff]
    %v44 = vld [vmem:[%s0 + $0x60] sm:$0xff]
    %v45 = vld [vmem:[%s0 + $0x68] sm:$0xff]
    %v46 = vld [vmem:[%s0 + $0x70] sm:$0xff]
    %v47 = vld [vmem:[%s0 + $0x78] sm:$0xff]
    %v48 = vpack.c.bf16 %v33, %v32
    %v49 = vpack.c.bf16 %v35, %v34
    %v50 = vpack.c.bf16 %v37, %v36
    %v51 = vpack.c.bf16 %v39, %v38
    %v52 = vpack.c.bf16 %v41, %v40
    %v53 = vpack.c.bf16 %v43, %v42
    %v54 = vpack.c.bf16 %v45, %v44
    %v55 = vpack.c.bf16 %v47, %v46
    %v56 = vld [vmem:[%s1] sm:$0x1]
    %v57 = vld [vmem:[#allocation2] sm:$0x1]
    %v58 = vperm.slane %v57, 0
    %vm59 = vcmask 15360
    %v61 = vsel %vm59, %v48, 0
    %v64 = vsel %vm59, %v49, 0
    %v67 = vsel %vm59, %v50, 0
    %v70 = vsel %vm59, %v51, 0
    %v73 = vsel %vm59, %v52, 0
    %v76 = vsel %vm59, %v53, 0
    %v79 = vsel %vm59, %v54, 0
    %v82 = vsel %vm59, %v55, 0
    %vm84 = vcmask 1040384
    %v86 = vsel %vm84, %v56, 0
    %88 = vmatpush.bf16.msra.mxu0 0
    %89 = vmatpush.bf16.msra.mxu0 0
    %90 = vmatpush.bf16.msra.mxu0 0
    %91 = vmatpush.bf16.msra.mxu0 0
    %92 = vmatpush.bf16.msra.mxu0 0
    %93 = vmatpush.bf16.msra.mxu0 0
    %94 = vmatpush.bf16.msra.mxu0 0
    %95 = vmatpush.bf16.msra.mxu0 %v86
    %96 = vmatmul.bf16.gmra.mxu0 %v61
    %v97 = vpop.f32.mrf.mxu0
    %v98 = vadd.f32 %v58, %v97
    %v99 = vpop.f32.mrf.mxu0
    %v100 = vadd.f32 %v58, %v99
    %101 = vmatmul.bf16.gmra.mxu0 %v64
    %v102 = vpop.f32.mrf.mxu0
    %v103 = vadd.f32 %v58, %v102
    %v104 = vpop.f32.mrf.mxu0
    %v105 = vadd.f32 %v58, %v104
    %106 = vmatmul.bf16.gmra.mxu0 %v67
    %v107 = vpop.f32.mrf.mxu0
    %v108 = vadd.f32 %v58, %v107
    %v109 = vpop.f32.mrf.mxu0
    %v110 = vadd.f32 %v58, %v109
    %111 = vmatmul.bf16.gmra.mxu0 %v70
    %v112 = vpop.f32.mrf.mxu0
    %v113 = vadd.f32 %v58, %v112
    %v114 = vpop.f32.mrf.mxu0
    %v115 = vadd.f32 %v58, %v114
    %116 = vmatmul.bf16.gmra.mxu0 %v73
    %v117 = vpop.f32.mrf.mxu0
    %v118 = vadd.f32 %v58, %v117
    %v119 = vpop.f32.mrf.mxu0
    %v120 = vadd.f32 %v58, %v119
    %121 = vmatmul.bf16.gmra.mxu0 %v76
    %v122 = vpop.f32.mrf.mxu0
    %v123 = vadd.f32 %v58, %v122
    %v124 = vpop.f32.mrf.mxu0
    %v125 = vadd.f32 %v58, %v124
    %126 = vmatmul.bf16.gmra.mxu0 %v79
    %v127 = vpop.f32.mrf.mxu0
    %v128 = vadd.f32 %v58, %v127
    %v129 = vpop.f32.mrf.mxu0
    %v130 = vadd.f32 %v58, %v129
    %131 = vmatmul.bf16.gmra.mxu0 %v82
    %v132 = vpop.f32.mrf.mxu0
    %v133 = vadd.f32 %v58, %v132
    %v134 = vpop.f32.mrf.mxu0
    %v135 = vadd.f32 %v58, %v134
    %136 = vdwg.mxu0
    %v137 = vld [vmem:[%s1 + $0x18] sm:$0xf]
    %v138 = vld [vmem:[%s1 + $0x24] sm:$0xf]
    %v139 = vld [vmem:[%s1 + $0x30] sm:$0xf]
    %v140 = vld [vmem:[%s1 + $0x3c] sm:$0xf]
    %v141 = vld [vmem:[%s1 + $0x48] sm:$0xf]
    %v142 = vld [vmem:[#allocation2 + $0x8] sm:$0x1]
    %v143 = vlaneseq
    %v144 = vand.u32 %v143, 127
    %vm145 = vcmp.lt.s32.totalorder %v144, 0
    %v146 = vsub.s32 0, %v144
    %v147 = vsel %vm145, %v146, %v144
    %v148 = vand.u32 %v147, 65535
    %v149 = vshrl.u32 %v147, 16
    %v151 = vmul.u32 %v148, 52429
    %v152 = vmul.u32 %v148, 52428
    %v153 = vmul.u32 %v149, 52429
    %v154 = vmul.u32 %v149, 52428
    %v155 = vshll.u32 %v152, 16
    %v156 = vshrl.u32 %v152, 16
    %v157 = vshll.u32 %v153, 16
    %v158 = vshrl.u32 %v153, 16
    %vm159 = vc.u32 %v151, %v155
    %v160 = vsel %vm159, 1, 0
    %v161 = vadd.s32 %v151, %v155
    %v162 = vadd.s32 %v154, %v160
    %vm163 = vc.u32 %v161, %v157
    %v164 = vsel %vm163, 1, 0
    %v165 = vadd.s32 %v161, %v157
    %v166 = vadd.s32 %v162, %v164
    %v167 = vadd.s32 %v166, %v156
    %v168 = vadd.s32 %v167, %v158
    %v169 = vshrl.u32 %v168, 5
    %v170 = vmul.u32 %v169, 40
    %v171 = vsub.s32 %v147, %v170
    %v172 = vsub.s32 0, %v171
    %v173 = vsel %vm145, %v172, %v171
    %vm174 = vcmp.ne.s32.totalorder %v173, 0
    %vm175 = vcmp.lt.s32.totalorder %v173, 0
    %vm176 = vmand %vm175, %vm174
    %v177 = vadd.s32 %v173, 40
    %v178 = vsel %vm176, %v177, %v173
    %vm179 = vcmp.lt.s32.totalorder %v178, 20
    %v180 = vsel %vm179, %v98, %v133
    %v181 = vsel %vm179, %v100, %v135
    %v187 = vunpack.c.l.b16 %v137
    %v188 = vunpack.c.l.b16 %v138
    %v189 = vunpack.c.l.b16 %v139
    %v190 = vunpack.c.l.b16 %v140
    %v191 = vunpack.c.l.b16 %v141
    %v192 = vpack.c.b16 %v188, %v187
    %v193 = vpack.c.b16 %v190, %v189
    %v194 = vpack.c.b16 %v191, %v191
    %vm197 = vcmask 326656
    %v199 = vsel %vm197, 0, 0
    %vm201 = vcmask 1043456
    %v203 = vsel %vm201, %v194, 0
    %205 = vmatpush.bf16.msra.mxu0 0
    %206 = vmatpush.bf16.msra.mxu0 0
    %207 = vmatpush.bf16.msra.mxu0 0
    %208 = vmatpush.bf16.msra.mxu0 0
    %209 = vmatpush.bf16.msra.mxu0 0
    %210 = vmatpush.bf16.msra.mxu0 %v203
    %211 = vmatpush.bf16.msra.mxu0 %v193
    %212 = vmatpush.bf16.msra.mxu0 %v192
    %213 = vmatmul.bf16.gmra.mxu0 %v199
    %v214 = vpop.f32.mrf.mxu0
    %v215 = vadd.f32 0.0, %v214
    %v216 = vpop.f32.mrf.mxu0
    %v217 = vadd.f32 0.0, %v216
    %218 = vdwg.mxu0
    %v219 = vadd.f32 %v180, %v215
    %v220 = vadd.f32 %v181, %v217
    %v221 = vxor.u32 %v219, 2147483648
    %v222 = vxor.u32 %v220, 2147483648
    %v223 = vmul.f32 %v221, 1.442695
    %v224 = vpow.pop %v223
    %v225 = vmul.f32 %v222, 1.442695
    %v226 = vpow.pop %v225
    %v227 = vadd.f32 %v224, 1.0
    %v228 = vadd.f32 %v226, 1.0
    %v229 = vrcp.pop %v227
    %v230 = vmul.f32 %v227, %v229
    %v231 = vsub.f32 1.0, %v230
    %v232 = vmul.f32 %v229, %v231
    %v233 = vadd.f32 %v229, %v232
    %vm234 = vweird.f32 %v227
    %vm235 = vweird.f32 %v229
    %vm236 = vmor %vm234, %vm235
    %v237 = vsel %vm236, %v229, %v233
    %v238 = vand.u32 2147483647, %v227
    %vm239 = vcmp.eq.f32.partialorder %v238, 8.507059e+37
    %v240 = vand.u32 %v227, 2147483648
    %v241 = vor.u32 1.1754944e-38, %v240
    %v242 = vsel %vm239, %v241, %v237
    %v243 = vmul.f32 1.0, %v242
    %v244 = vrcp.pop %v228
    %v245 = vmul.f32 %v228, %v244
    %v246 = vsub.f32 1.0, %v245
    %v247 = vmul.f32 %v244, %v246
    %v248 = vadd.f32 %v244, %v247
    %vm249 = vweird.f32 %v228
    %vm250 = vweird.f32 %v244
    %vm251 = vmor %vm249, %vm250
    %v252 = vsel %vm251, %v244, %v248
    %v253 = vand.u32 2147483647, %v228
    %vm254 = vcmp.eq.f32.partialorder %v253, 8.507059e+37
    %v255 = vand.u32 %v228, 2147483648
    %v256 = vor.u32 1.1754944e-38, %v255
    %v257 = vsel %vm254, %v256, %v252
    %v258 = vmul.f32 1.0, %v257
    %v259 = vperm.slane %v142, 0
    %261 = vrot.lane.b32.xlu0 %v259, 80
    %v262 = vpop.permute.xlu0 %261
    %v264 = vadd.f32 %v215, %v262
    %v265 = vadd.f32 %v217, %v262
    %268 = vrot.lane.b32.xlu0 %v264, 48
    %v269 = vpop.permute.xlu0 %268
    %270 = vrot.lane.b32.xlu0 %v265, 48
    %v271 = vpop.permute.xlu0 %270
    %v274 = vmul.f32 %v243, %v269
    %v275 = vmul.f32 %v258, %v271
    %278 = vrot.lane.b32.xlu0 %v274, 80
    %v279 = vpop.permute.xlu0 %278
    %280 = vrot.lane.b32.xlu0 %v275, 80
    %v281 = vpop.permute.xlu0 %280
    %v284 = vadd.f32 %v180, %v279
    %v285 = vadd.f32 %v181, %v281
    %v286 = vtanh.pop %v284
    %v287 = vtanh.pop %v285
    %v288 = vsub.f32 1.0, %v243
    %v289 = vsub.f32 1.0, %v258
    %292 = vrot.lane.b32.xlu0 %v286, 88
    %v293 = vpop.permute.xlu0 %292
    %294 = vrot.lane.b32.xlu0 %v287, 88
    %v295 = vpop.permute.xlu0 %294
    %v298 = vmul.f32 %v288, %v293
    %v299 = vmul.f32 %v289, %v295
    %v300 = vmul.f32 %v243, 0.0
    %v301 = vmul.f32 %v258, 0.0
    %v302 = vadd.f32 %v298, %v300
    %v303 = vadd.f32 %v299, %v301
    %v304 = vsel %vm179, %v103, %v128
    %v305 = vsel %vm179, %v105, %v130
    %v306 = vpack.c.bf16 %v303, %v302
    %308 = vrot.lane.b32.xlu0 %v306, 88
    %v309 = vpop.permute.xlu0 %308
    %v311 = vsel %vm197, %v309, 0
    %313 = vmatpush.bf16.msra.mxu0 0
    %314 = vmatpush.bf16.msra.mxu0 0
    %315 = vmatpush.bf16.msra.mxu0 0
    %316 = vmatpush.bf16.msra.mxu0 0
    %317 = vmatpush.bf16.msra.mxu0 0
    %318 = vmatpush.bf16.msra.mxu0 %v203
    %319 = vmatpush.bf16.msra.mxu0 %v193
    %320 = vmatpush.bf16.msra.mxu0 %v192
    %321 = vmatmul.bf16.gmra.mxu0 %v311
    %v322 = vpop.f32.mrf.mxu0
    %v323 = vadd.f32 0.0, %v322
    %v324 = vpop.f32.mrf.mxu0
    %v325 = vadd.f32 0.0, %v324
    %326 = vdwg.mxu0
    %v327 = vadd.f32 %v304, %v323
    %v328 = vadd.f32 %v305, %v325
    %v329 = vxor.u32 %v327, 2147483648
    %v330 = vxor.u32 %v328, 2147483648
    %v331 = vmul.f32 %v329, 1.442695
    %v332 = vpow.pop %v331
    %v333 = vmul.f32 %v330, 1.442695
    %v334 = vpow.pop %v333
    %v335 = vadd.f32 %v332, 1.0
    %v336 = vadd.f32 %v334, 1.0
    %v337 = vrcp.pop %v335
    %v338 = vmul.f32 %v335, %v337
    %v339 = vsub.f32 1.0, %v338
    %v340 = vmul.f32 %v337, %v339
    %v341 = vadd.f32 %v337, %v340
    %vm342 = vweird.f32 %v335
    %vm343 = vweird.f32 %v337
    %vm344 = vmor %vm342, %vm343
    %v345 = vsel %vm344, %v337, %v341
    %v346 = vand.u32 2147483647, %v335
    %vm347 = vcmp.eq.f32.partialorder %v346, 8.507059e+37
    %v348 = vand.u32 %v335, 2147483648
    %v349 = vor.u32 1.1754944e-38, %v348
    %v350 = vsel %vm347, %v349, %v345
    %v351 = vmul.f32 1.0, %v350
    %v352 = vrcp.pop %v336
    %v353 = vmul.f32 %v336, %v352
    %v354 = vsub.f32 1.0, %v353
    %v355 = vmul.f32 %v352, %v354
    %v356 = vadd.f32 %v352, %v355
    %vm357 = vweird.f32 %v336
    %vm358 = vweird.f32 %v352
    %vm359 = vmor %vm357, %vm358
    %v360 = vsel %vm359, %v352, %v356
    %v361 = vand.u32 2147483647, %v336
    %vm362 = vcmp.eq.f32.partialorder %v361, 8.507059e+37
    %v363 = vand.u32 %v336, 2147483648
    %v364 = vor.u32 1.1754944e-38, %v363
    %v365 = vsel %vm362, %v364, %v360
    %v366 = vmul.f32 1.0, %v365
    %v367 = vadd.f32 %v323, %v262
    %v368 = vadd.f32 %v325, %v262
    %371 = vrot.lane.b32.xlu0 %v367, 48
    %v372 = vpop.permute.xlu0 %371
    %373 = vrot.lane.b32.xlu0 %v368, 48
    %v374 = vpop.permute.xlu0 %373
    %v377 = vmul.f32 %v351, %v372
    %v378 = vmul.f32 %v366, %v374
    %381 = vrot.lane.b32.xlu0 %v377, 80
    %v382 = vpop.permute.xlu0 %381
    %383 = vrot.lane.b32.xlu0 %v378, 80
    %v384 = vpop.permute.xlu0 %383
    %v387 = vadd.f32 %v304, %v382
    %v388 = vadd.f32 %v305, %v384
    %v389 = vtanh.pop %v387
    %v390 = vtanh.pop %v388
    %v391 = vsub.f32 1.0, %v351
    %v392 = vsub.f32 1.0, %v366
    %395 = vrot.lane.b32.xlu0 %v389, 88
    %v396 = vpop.permute.xlu0 %395
    %397 = vrot.lane.b32.xlu0 %v390, 88
    %v398 = vpop.permute.xlu0 %397
    %v401 = vmul.f32 %v391, %v396
    %v402 = vmul.f32 %v392, %v398
    %v403 = vmul.f32 %v351, %v302
    %v404 = vmul.f32 %v366, %v303
    %v405 = vadd.f32 %v401, %v403
    %v406 = vadd.f32 %v402, %v404
    %v407 = vsel %vm179, %v108, %v123
    %v408 = vsel %vm179, %v110, %v125
    %v409 = vpack.c.bf16 %v406, %v405
    %411 = vrot.lane.b32.xlu0 %v409, 88
    %v412 = vpop.permute.xlu0 %411
    %v414 = vsel %vm197, %v412, 0
    %416 = vmatpush.bf16.msra.mxu0 0
    %417 = vmatpush.bf16.msra.mxu0 0
    %418 = vmatpush.bf16.msra.mxu0 0
    %419 = vmatpush.bf16.msra.mxu0 0
    %420 = vmatpush.bf16.msra.mxu0 0
    %421 = vmatpush.bf16.msra.mxu0 %v203
    %422 = vmatpush.bf16.msra.mxu0 %v193
    %423 = vmatpush.bf16.msra.mxu0 %v192
    %424 = vmatmul.bf16.gmra.mxu0 %v414
    %v425 = vpop.f32.mrf.mxu0
    %v426 = vadd.f32 0.0, %v425
    %v427 = vpop.f32.mrf.mxu0
    %v428 = vadd.f32 0.0, %v427
    %429 = vdwg.mxu0
    %v430 = vadd.f32 %v407, %v426
    %v431 = vadd.f32 %v408, %v428
    %v432 = vxor.u32 %v430, 2147483648
    %v433 = vxor.u32 %v431, 2147483648
    %v434 = vmul.f32 %v432, 1.442695
    %v435 = vpow.pop %v434
    %v436 = vmul.f32 %v433, 1.442695
    %v437 = vpow.pop %v436
    %v438 = vadd.f32 %v435, 1.0
    %v439 = vadd.f32 %v437, 1.0
    %v440 = vrcp.pop %v438
    %v441 = vmul.f32 %v438, %v440
    %v442 = vsub.f32 1.0, %v441
    %v443 = vmul.f32 %v440, %v442
    %v444 = vadd.f32 %v440, %v443
    %vm445 = vweird.f32 %v438
    %vm446 = vweird.f32 %v440
    %vm447 = vmor %vm445, %vm446
    %v448 = vsel %vm447, %v440, %v444
    %v449 = vand.u32 2147483647, %v438
    %vm450 = vcmp.eq.f32.partialorder %v449, 8.507059e+37
    %v451 = vand.u32 %v438, 2147483648
    %v452 = vor.u32 1.1754944e-38, %v451
    %v453 = vsel %vm450, %v452, %v448
    %v454 = vmul.f32 1.0, %v453
    %v455 = vrcp.pop %v439
    %v456 = vmul.f32 %v439, %v455
    %v457 = vsub.f32 1.0, %v456
    %v458 = vmul.f32 %v455, %v457
    %v459 = vadd.f32 %v455, %v458
    %vm460 = vweird.f32 %v439
    %vm461 = vweird.f32 %v455
    %vm462 = vmor %vm460, %vm461
    %v463 = vsel %vm462, %v455, %v459
    %v464 = vand.u32 2147483647, %v439
    %vm465 = vcmp.eq.f32.partialorder %v464, 8.507059e+37
    %v466 = vand.u32 %v439, 2147483648
    %v467 = vor.u32 1.1754944e-38, %v466
    %v468 = vsel %vm465, %v467, %v463
    %v469 = vmul.f32 1.0, %v468
    %v470 = vadd.f32 %v426, %v262
    %v471 = vadd.f32 %v428, %v262
    %474 = vrot.lane.b32.xlu0 %v470, 48
    %v475 = vpop.permute.xlu0 %474
    %476 = vrot.lane.b32.xlu0 %v471, 48
    %v477 = vpop.permute.xlu0 %476
    %v480 = vmul.f32 %v454, %v475
    %v481 = vmul.f32 %v469, %v477
    %484 = vrot.lane.b32.xlu0 %v480, 80
    %v485 = vpop.permute.xlu0 %484
    %486 = vrot.lane.b32.xlu0 %v481, 80
    %v487 = vpop.permute.xlu0 %486
    %v490 = vadd.f32 %v407, %v485
    %v491 = vadd.f32 %v408, %v487
    %v492 = vtanh.pop %v490
    %v493 = vtanh.pop %v491
    %v494 = vsub.f32 1.0, %v454
    %v495 = vsub.f32 1.0, %v469
    %498 = vrot.lane.b32.xlu0 %v492, 88
    %v499 = vpop.permute.xlu0 %498
    %500 = vrot.lane.b32.xlu0 %v493, 88
    %v501 = vpop.permute.xlu0 %500
    %v504 = vmul.f32 %v494, %v499
    %v505 = vmul.f32 %v495, %v501
    %v506 = vmul.f32 %v454, %v405
    %v507 = vmul.f32 %v469, %v406
    %v508 = vadd.f32 %v504, %v506
    %v509 = vadd.f32 %v505, %v507
    %v510 = vsel %vm179, %v113, %v118
    %v511 = vsel %vm179, %v115, %v120
    %v512 = vpack.c.bf16 %v509, %v508
    %514 = vrot.lane.b32.xlu0 %v512, 88
    %v515 = vpop.permute.xlu0 %514
    %v517 = vsel %vm197, %v515, 0
    %519 = vmatpush.bf16.msra.mxu0 0
    %520 = vmatpush.bf16.msra.mxu0 0
    %521 = vmatpush.bf16.msra.mxu0 0
    %522 = vmatpush.bf16.msra.mxu0 0
    %523 = vmatpush.bf16.msra.mxu0 0
    %524 = vmatpush.bf16.msra.mxu0 %v203
    %525 = vmatpush.bf16.msra.mxu0 %v193
    %526 = vmatpush.bf16.msra.mxu0 %v192
    %527 = vmatmul.bf16.gmra.mxu0 %v517
    %v528 = vpop.f32.mrf.mxu0
    %v529 = vadd.f32 0.0, %v528
    %v530 = vpop.f32.mrf.mxu0
    %v531 = vadd.f32 0.0, %v530
    %532 = vdwg.mxu0
    %v533 = vadd.f32 %v510, %v529
    %v534 = vadd.f32 %v511, %v531
    %v535 = vxor.u32 %v533, 2147483648
    %v536 = vxor.u32 %v534, 2147483648
    %v537 = vmul.f32 %v535, 1.442695
    %v538 = vpow.pop %v537
    %v539 = vmul.f32 %v536, 1.442695
    %v540 = vpow.pop %v539
    %v541 = vadd.f32 %v538, 1.0
    %v542 = vadd.f32 %v540, 1.0
    %v543 = vrcp.pop %v541
    %v544 = vmul.f32 %v541, %v543
    %v545 = vsub.f32 1.0, %v544
    %v546 = vmul.f32 %v543, %v545
    %v547 = vadd.f32 %v543, %v546
    %vm548 = vweird.f32 %v541
    %vm549 = vweird.f32 %v543
    %vm550 = vmor %vm548, %vm549
    %v551 = vsel %vm550, %v543, %v547
    %v552 = vand.u32 2147483647, %v541
    %vm553 = vcmp.eq.f32.partialorder %v552, 8.507059e+37
    %v554 = vand.u32 %v541, 2147483648
    %v555 = vor.u32 1.1754944e-38, %v554
    %v556 = vsel %vm553, %v555, %v551
    %v557 = vmul.f32 1.0, %v556
    %v558 = vrcp.pop %v542
    %v559 = vmul.f32 %v542, %v558
    %v560 = vsub.f32 1.0, %v559
    %v561 = vmul.f32 %v558, %v560
    %v562 = vadd.f32 %v558, %v561
    %vm563 = vweird.f32 %v542
    %vm564 = vweird.f32 %v558
    %vm565 = vmor %vm563, %vm564
    %v566 = vsel %vm565, %v558, %v562
    %v567 = vand.u32 2147483647, %v542
    %vm568 = vcmp.eq.f32.partialorder %v567, 8.507059e+37
    %v569 = vand.u32 %v542, 2147483648
    %v570 = vor.u32 1.1754944e-38, %v569
    %v571 = vsel %vm568, %v570, %v566
    %v572 = vmul.f32 1.0, %v571
    %v573 = vadd.f32 %v529, %v262
    %v574 = vadd.f32 %v531, %v262
    %577 = vrot.lane.b32.xlu0 %v573, 48
    %v578 = vpop.permute.xlu0 %577
    %579 = vrot.lane.b32.xlu0 %v574, 48
    %v580 = vpop.permute.xlu0 %579
    %v583 = vmul.f32 %v557, %v578
    %v584 = vmul.f32 %v572, %v580
    %587 = vrot.lane.b32.xlu0 %v583, 80
    %v588 = vpop.permute.xlu0 %587
    %589 = vrot.lane.b32.xlu0 %v584, 80
    %v590 = vpop.permute.xlu0 %589
    %v593 = vadd.f32 %v510, %v588
    %v594 = vadd.f32 %v511, %v590
    %v595 = vtanh.pop %v593
    %v596 = vtanh.pop %v594
    %v597 = vsub.f32 1.0, %v557
    %v598 = vsub.f32 1.0, %v572
    %601 = vrot.lane.b32.xlu0 %v595, 88
    %v602 = vpop.permute.xlu0 %601
    %603 = vrot.lane.b32.xlu0 %v596, 88
    %v604 = vpop.permute.xlu0 %603
    %v607 = vmul.f32 %v597, %v602
    %v608 = vmul.f32 %v598, %v604
    %v609 = vmul.f32 %v557, %v508
    %v610 = vmul.f32 %v572, %v509
    %v611 = vadd.f32 %v607, %v609
    %v612 = vadd.f32 %v608, %v610
    %v613 = vsel %vm179, %v118, %v113
    %v614 = vsel %vm179, %v120, %v115
    %v615 = vpack.c.bf16 %v612, %v611
    %617 = vrot.lane.b32.xlu0 %v615, 88
    %v618 = vpop.permute.xlu0 %617
    %v620 = vsel %vm197, %v618, 0
    %622 = vmatpush.bf16.msra.mxu0 0
    %623 = vmatpush.bf16.msra.mxu0 0
    %624 = vmatpush.bf16.msra.mxu0 0
    %625 = vmatpush.bf16.msra.mxu0 0
    %626 = vmatpush.bf16.msra.mxu0 0
    %627 = vmatpush.bf16.msra.mxu0 %v203
    %628 = vmatpush.bf16.msra.mxu0 %v193
    %629 = vmatpush.bf16.msra.mxu0 %v192
    %630 = vmatmul.bf16.gmra.mxu0 %v620
    %v631 = vpop.f32.mrf.mxu0
    %v632 = vadd.f32 0.0, %v631
    %v633 = vpop.f32.mrf.mxu0
    %v634 = vadd.f32 0.0, %v633
    %635 = vdwg.mxu0
    %v636 = vadd.f32 %v613, %v632
    %v637 = vadd.f32 %v614, %v634
    %v638 = vxor.u32 %v636, 2147483648
    %v639 = vxor.u32 %v637, 2147483648
    %v640 = vmul.f32 %v638, 1.442695
    %v641 = vpow.pop %v640
    %v642 = vmul.f32 %v639, 1.442695
    %v643 = vpow.pop %v642
    %v644 = vadd.f32 %v641, 1.0
    %v645 = vadd.f32 %v643, 1.0
    %v646 = vrcp.pop %v644
    %v647 = vmul.f32 %v644, %v646
    %v648 = vsub.f32 1.0, %v647
    %v649 = vmul.f32 %v646, %v648
    %v650 = vadd.f32 %v646, %v649
    %vm651 = vweird.f32 %v644
    %vm652 = vweird.f32 %v646
    %vm653 = vmor %vm651, %vm652
    %v654 = vsel %vm653, %v646, %v650
    %v655 = vand.u32 2147483647, %v644
    %vm656 = vcmp.eq.f32.partialorder %v655, 8.507059e+37
    %v657 = vand.u32 %v644, 2147483648
    %v658 = vor.u32 1.1754944e-38, %v657
    %v659 = vsel %vm656, %v658, %v654
    %v660 = vmul.f32 1.0, %v659
    %v661 = vrcp.pop %v645
    %v662 = vmul.f32 %v645, %v661
    %v663 = vsub.f32 1.0, %v662
    %v664 = vmul.f32 %v661, %v663
    %v665 = vadd.f32 %v661, %v664
    %vm666 = vweird.f32 %v645
    %vm667 = vweird.f32 %v661
    %vm668 = vmor %vm666, %vm667
    %v669 = vsel %vm668, %v661, %v665
    %v670 = vand.u32 2147483647, %v645
    %vm671 = vcmp.eq.f32.partialorder %v670, 8.507059e+37
    %v672 = vand.u32 %v645, 2147483648
    %v673 = vor.u32 1.1754944e-38, %v672
    %v674 = vsel %vm671, %v673, %v669
    %v675 = vmul.f32 1.0, %v674
    %v676 = vadd.f32 %v632, %v262
    %v677 = vadd.f32 %v634, %v262
    %680 = vrot.lane.b32.xlu0 %v676, 48
    %v681 = vpop.permute.xlu0 %680
    %682 = vrot.lane.b32.xlu0 %v677, 48
    %v683 = vpop.permute.xlu0 %682
    %v686 = vmul.f32 %v660, %v681
    %v687 = vmul.f32 %v675, %v683
    %690 = vrot.lane.b32.xlu0 %v686, 80
    %v691 = vpop.permute.xlu0 %690
    %692 = vrot.lane.b32.xlu0 %v687, 80
    %v693 = vpop.permute.xlu0 %692
    %v696 = vadd.f32 %v613, %v691
    %v697 = vadd.f32 %v614, %v693
    %v698 = vtanh.pop %v696
    %v699 = vtanh.pop %v697
    %v700 = vsub.f32 1.0, %v660
    %v701 = vsub.f32 1.0, %v675
    %704 = vrot.lane.b32.xlu0 %v698, 88
    %v705 = vpop.permute.xlu0 %704
    %706 = vrot.lane.b32.xlu0 %v699, 88
    %v707 = vpop.permute.xlu0 %706
    %v710 = vmul.f32 %v700, %v705
    %v711 = vmul.f32 %v701, %v707
    %v712 = vmul.f32 %v660, %v611
    %v713 = vmul.f32 %v675, %v612
    %v714 = vadd.f32 %v710, %v712
    %v715 = vadd.f32 %v711, %v713
    %v716 = vsel %vm179, %v123, %v108
    %v717 = vsel %vm179, %v125, %v110
    %v718 = vpack.c.bf16 %v715, %v714
    %720 = vrot.lane.b32.xlu0 %v718, 88
    %v721 = vpop.permute.xlu0 %720
    %v723 = vsel %vm197, %v721, 0
    %725 = vmatpush.bf16.msra.mxu0 0
    %726 = vmatpush.bf16.msra.mxu0 0
    %727 = vmatpush.bf16.msra.mxu0 0
    %728 = vmatpush.bf16.msra.mxu0 0
    %729 = vmatpush.bf16.msra.mxu0 0
    %730 = vmatpush.bf16.msra.mxu0 %v203
    %731 = vmatpush.bf16.msra.mxu0 %v193
    %732 = vmatpush.bf16.msra.mxu0 %v192
    %733 = vmatmul.bf16.gmra.mxu0 %v723
    %v734 = vpop.f32.mrf.mxu0
    %v735 = vadd.f32 0.0, %v734
    %v736 = vpop.f32.mrf.mxu0
    %v737 = vadd.f32 0.0, %v736
    %738 = vdwg.mxu0
    %v739 = vadd.f32 %v716, %v735
    %v740 = vadd.f32 %v717, %v737
    %v741 = vxor.u32 %v739, 2147483648
    %v742 = vxor.u32 %v740, 2147483648
    %v743 = vmul.f32 %v741, 1.442695
    %v744 = vpow.pop %v743
    %v745 = vmul.f32 %v742, 1.442695
    %v746 = vpow.pop %v745
    %v747 = vadd.f32 %v744, 1.0
    %v748 = vadd.f32 %v746, 1.0
    %v749 = vrcp.pop %v747
    %v750 = vmul.f32 %v747, %v749
    %v751 = vsub.f32 1.0, %v750
    %v752 = vmul.f32 %v749, %v751
    %v753 = vadd.f32 %v749, %v752
    %vm754 = vweird.f32 %v747
    %vm755 = vweird.f32 %v749
    %vm756 = vmor %vm754, %vm755
    %v757 = vsel %vm756, %v749, %v753
    %v758 = vand.u32 2147483647, %v747
    %vm759 = vcmp.eq.f32.partialorder %v758, 8.507059e+37
    %v760 = vand.u32 %v747, 2147483648
    %v761 = vor.u32 1.1754944e-38, %v760
    %v762 = vsel %vm759, %v761, %v757
    %v763 = vmul.f32 1.0, %v762
    %v764 = vrcp.pop %v748
    %v765 = vmul.f32 %v748, %v764
    %v766 = vsub.f32 1.0, %v765
    %v767 = vmul.f32 %v764, %v766
    %v768 = vadd.f32 %v764, %v767
    %vm769 = vweird.f32 %v748
    %vm770 = vweird.f32 %v764
    %vm771 = vmor %vm769, %vm770
    %v772 = vsel %vm771, %v764, %v768
    %v773 = vand.u32 2147483647, %v748
    %vm774 = vcmp.eq.f32.partialorder %v773, 8.507059e+37
    %v775 = vand.u32 %v748, 2147483648
    %v776 = vor.u32 1.1754944e-38, %v775
    %v777 = vsel %vm774, %v776, %v772
    %v778 = vmul.f32 1.0, %v777
    %v779 = vadd.f32 %v735, %v262
    %v780 = vadd.f32 %v737, %v262
    %783 = vrot.lane.b32.xlu0 %v779, 48
    %v784 = vpop.permute.xlu0 %783
    %785 = vrot.lane.b32.xlu0 %v780, 48
    %v786 = vpop.permute.xlu0 %785
    %v789 = vmul.f32 %v763, %v784
    %v790 = vmul.f32 %v778, %v786
    %793 = vrot.lane.b32.xlu0 %v789, 80
    %v794 = vpop.permute.xlu0 %793
    %795 = vrot.lane.b32.xlu0 %v790, 80
    %v796 = vpop.permute.xlu0 %795
    %v799 = vadd.f32 %v716, %v794
    %v800 = vadd.f32 %v717, %v796
    %v801 = vtanh.pop %v799
    %v802 = vtanh.pop %v800
    %v803 = vsub.f32 1.0, %v763
    %v804 = vsub.f32 1.0, %v778
    %807 = vrot.lane.b32.xlu0 %v801, 88
    %v808 = vpop.permute.xlu0 %807
    %809 = vrot.lane.b32.xlu0 %v802, 88
    %v810 = vpop.permute.xlu0 %809
    %v813 = vmul.f32 %v803, %v808
    %v814 = vmul.f32 %v804, %v810
    %v815 = vmul.f32 %v763, %v714
    %v816 = vmul.f32 %v778, %v715
    %v817 = vadd.f32 %v813, %v815
    %v818 = vadd.f32 %v814, %v816
    %v819 = vsel %vm179, %v128, %v103
    %v820 = vsel %vm179, %v130, %v105
    %v821 = vpack.c.bf16 %v818, %v817
    %823 = vrot.lane.b32.xlu0 %v821, 88
    %v824 = vpop.permute.xlu0 %823
    %v826 = vsel %vm197, %v824, 0
    %828 = vmatpush.bf16.msra.mxu0 0
    %829 = vmatpush.bf16.msra.mxu0 0
    %830 = vmatpush.bf16.msra.mxu0 0
    %831 = vmatpush.bf16.msra.mxu0 0
    %832 = vmatpush.bf16.msra.mxu0 0
    %833 = vmatpush.bf16.msra.mxu0 %v203
    %834 = vmatpush.bf16.msra.mxu0 %v193
    %835 = vmatpush.bf16.msra.mxu0 %v192
    %836 = vmatmul.bf16.gmra.mxu0 %v826
    %v837 = vpop.f32.mrf.mxu0
    %v838 = vadd.f32 0.0, %v837
    %v839 = vpop.f32.mrf.mxu0
    %v840 = vadd.f32 0.0, %v839
    %841 = vdwg.mxu0
    %v842 = vadd.f32 %v819, %v838
    %v843 = vadd.f32 %v820, %v840
    %v844 = vxor.u32 %v842, 2147483648
    %v845 = vxor.u32 %v843, 2147483648
    %v846 = vmul.f32 %v844, 1.442695
    %v847 = vpow.pop %v846
    %v848 = vmul.f32 %v845, 1.442695
    %v849 = vpow.pop %v848
    %v850 = vadd.f32 %v847, 1.0
    %v851 = vadd.f32 %v849, 1.0
    %v852 = vrcp.pop %v850
    %v853 = vmul.f32 %v850, %v852
    %v854 = vsub.f32 1.0, %v853
    %v855 = vmul.f32 %v852, %v854
    %v856 = vadd.f32 %v852, %v855
    %vm857 = vweird.f32 %v850
    %vm858 = vweird.f32 %v852
    %vm859 = vmor %vm857, %vm858
    %v860 = vsel %vm859, %v852, %v856
    %v861 = vand.u32 2147483647, %v850
    %vm862 = vcmp.eq.f32.partialorder %v861, 8.507059e+37
    %v863 = vand.u32 %v850, 2147483648
    %v864 = vor.u32 1.1754944e-38, %v863
    %v865 = vsel %vm862, %v864, %v860
    %v866 = vmul.f32 1.0, %v865
    %v867 = vrcp.pop %v851
    %v868 = vmul.f32 %v851, %v867
    %v869 = vsub.f32 1.0, %v868
    %v870 = vmul.f32 %v867, %v869
    %v871 = vadd.f32 %v867, %v870
    %vm872 = vweird.f32 %v851
    %vm873 = vweird.f32 %v867
    %vm874 = vmor %vm872, %vm873
    %v875 = vsel %vm874, %v867, %v871
    %v876 = vand.u32 2147483647, %v851
    %vm877 = vcmp.eq.f32.partialorder %v876, 8.507059e+37
    %v878 = vand.u32 %v851, 2147483648
    %v879 = vor.u32 1.1754944e-38, %v878
    %v880 = vsel %vm877, %v879, %v875
    %v881 = vmul.f32 1.0, %v880
    %v882 = vadd.f32 %v838, %v262
    %v883 = vadd.f32 %v840, %v262
    %886 = vrot.lane.b32.xlu0 %v882, 48
    %v887 = vpop.permute.xlu0 %886
    %888 = vrot.lane.b32.xlu0 %v883, 48
    %v889 = vpop.permute.xlu0 %888
    %v892 = vmul.f32 %v866, %v887
    %v893 = vmul.f32 %v881, %v889
    %896 = vrot.lane.b32.xlu0 %v892, 80
    %v897 = vpop.permute.xlu0 %896
    %898 = vrot.lane.b32.xlu0 %v893, 80
    %v899 = vpop.permute.xlu0 %898
    %v902 = vadd.f32 %v819, %v897
    %v903 = vadd.f32 %v820, %v899
    %v904 = vtanh.pop %v902
    %v905 = vtanh.pop %v903
    %v906 = vsub.f32 1.0, %v866
    %v907 = vsub.f32 1.0, %v881
    %910 = vrot.lane.b32.xlu0 %v904, 88
    %v911 = vpop.permute.xlu0 %910
    %912 = vrot.lane.b32.xlu0 %v905, 88
    %v913 = vpop.permute.xlu0 %912
    %v916 = vmul.f32 %v906, %v911
    %v917 = vmul.f32 %v907, %v913
    %v918 = vmul.f32 %v866, %v817
    %v919 = vmul.f32 %v881, %v818
    %v920 = vadd.f32 %v916, %v918
    %v921 = vadd.f32 %v917, %v919
    %v922 = vsel %vm179, %v133, %v98
    %v923 = vsel %vm179, %v135, %v100
    %v924 = vpack.c.bf16 %v921, %v920
    %926 = vrot.lane.b32.xlu0 %v924, 88
    %v927 = vpop.permute.xlu0 %926
    %v929 = vsel %vm197, %v927, 0
    %931 = vmatpush.bf16.msra.mxu0 0
    %932 = vmatpush.bf16.msra.mxu0 0
    %933 = vmatpush.bf16.msra.mxu0 0
    %934 = vmatpush.bf16.msra.mxu0 0
    %935 = vmatpush.bf16.msra.mxu0 0
    %936 = vmatpush.bf16.msra.mxu0 %v203
    %937 = vmatpush.bf16.msra.mxu0 %v193
    %938 = vmatpush.bf16.msra.mxu0 %v192
    %939 = vmatmul.bf16.gmra.mxu0 %v929
    %v940 = vpop.f32.mrf.mxu0
    %v941 = vadd.f32 0.0, %v940
    %v942 = vpop.f32.mrf.mxu0
    %v943 = vadd.f32 0.0, %v942
    %944 = vdwg.mxu0
    %v945 = vadd.f32 %v922, %v941
    %v946 = vadd.f32 %v923, %v943
    %v947 = vxor.u32 %v945, 2147483648
    %v948 = vxor.u32 %v946, 2147483648
    %v949 = vmul.f32 %v947, 1.442695
    %v950 = vpow.pop %v949
    %v951 = vmul.f32 %v948, 1.442695
    %v952 = vpow.pop %v951
    %v953 = vadd.f32 %v950, 1.0
    %v954 = vadd.f32 %v952, 1.0
    %v955 = vrcp.pop %v953
    %v956 = vmul.f32 %v953, %v955
    %v957 = vsub.f32 1.0, %v956
    %v958 = vmul.f32 %v955, %v957
    %v959 = vadd.f32 %v955, %v958
    %vm960 = vweird.f32 %v953
    %vm961 = vweird.f32 %v955
    %vm962 = vmor %vm960, %vm961
    %v963 = vsel %vm962, %v955, %v959
    %v964 = vand.u32 2147483647, %v953
    %vm965 = vcmp.eq.f32.partialorder %v964, 8.507059e+37
    %v966 = vand.u32 %v953, 2147483648
    %v967 = vor.u32 1.1754944e-38, %v966
    %v968 = vsel %vm965, %v967, %v963
    %v969 = vmul.f32 1.0, %v968
    %v970 = vrcp.pop %v954
    %v971 = vmul.f32 %v954, %v970
    %v972 = vsub.f32 1.0, %v971
    %v973 = vmul.f32 %v970, %v972
    %v974 = vadd.f32 %v970, %v973
    %vm975 = vweird.f32 %v954
    %vm976 = vweird.f32 %v970
    %vm977 = vmor %vm975, %vm976
    %v978 = vsel %vm977, %v970, %v974
    %v979 = vand.u32 2147483647, %v954
    %vm980 = vcmp.eq.f32.partialorder %v979, 8.507059e+37
    %v981 = vand.u32 %v954, 2147483648
    %v982 = vor.u32 1.1754944e-38, %v981
    %v983 = vsel %vm980, %v982, %v978
    %v984 = vmul.f32 1.0, %v983
    %v985 = vadd.f32 %v941, %v262
    %v986 = vadd.f32 %v943, %v262
    %989 = vrot.lane.b32.xlu0 %v985, 48
    %v990 = vpop.permute.xlu0 %989
    %991 = vrot.lane.b32.xlu0 %v986, 48
    %v992 = vpop.permute.xlu0 %991
    %v995 = vmul.f32 %v969, %v990
    %v996 = vmul.f32 %v984, %v992
    %999 = vrot.lane.b32.xlu0 %v995, 80
    %v1000 = vpop.permute.xlu0 %999
    %1001 = vrot.lane.b32.xlu0 %v996, 80
    %v1002 = vpop.permute.xlu0 %1001
    %v1005 = vadd.f32 %v922, %v1000
    %v1006 = vadd.f32 %v923, %v1002
    %v1007 = vtanh.pop %v1005
    %v1008 = vtanh.pop %v1006
    %v1009 = vsub.f32 1.0, %v969
    %v1010 = vsub.f32 1.0, %v984
    %1013 = vrot.lane.b32.xlu0 %v1007, 88
    %v1014 = vpop.permute.xlu0 %1013
    %1015 = vrot.lane.b32.xlu0 %v1008, 88
    %v1016 = vpop.permute.xlu0 %1015
    %v1019 = vmul.f32 %v1009, %v1014
    %v1020 = vmul.f32 %v1010, %v1016
    %v1021 = vmul.f32 %v969, %v920
    %v1022 = vmul.f32 %v984, %v921
    %v1023 = vadd.f32 %v1019, %v1021
    %v1024 = vadd.f32 %v1020, %v1022
    %v1025 = vpack.c.bf16 %v1024, %v1023
    %v1026 = vld [vmem:[%s1 + $0x60] sm:$0xf]
    %v1027 = vld [vmem:[%s1 + $0x6c] sm:$0xf]
    %v1028 = vld [vmem:[%s1 + $0x78] sm:$0xf]
    %v1029 = vld [vmem:[%s1 + $0x84] sm:$0xf]
    %v1030 = vld [vmem:[%s1 + $0x90] sm:$0xf]
    %1032 = vrot.lane.b32.xlu0 %v1025, 88
    %v1033 = vpop.permute.xlu0 %1032
    %v1039 = vunpack.c.l.b16 %v1026
    %v1040 = vunpack.c.l.b16 %v1027
    %v1041 = vunpack.c.l.b16 %v1028
    %v1042 = vunpack.c.l.b16 %v1029
    %v1043 = vunpack.c.l.b16 %v1030
    %v1044 = vpack.c.b16 %v1040, %v1039
    %v1045 = vpack.c.b16 %v1042, %v1041
    %v1046 = vpack.c.b16 %v1043, %v1043
    %v1050 = vsel %vm197, %v1033, 0
    %v1053 = vsel %vm201, %v1046, 0
    %1055 = vmatpush.bf16.msra.mxu0 0
    %1056 = vmatpush.bf16.msra.mxu0 0
    %1057 = vmatpush.bf16.msra.mxu0 0
    %1058 = vmatpush.bf16.msra.mxu0 0
    %1059 = vmatpush.bf16.msra.mxu0 0
    %1060 = vmatpush.bf16.msra.mxu0 %v1053
    %1061 = vmatpush.bf16.msra.mxu0 %v1045
    %1062 = vmatpush.bf16.msra.mxu0 %v1044
    %1063 = vmatmul.bf16.gmra.mxu0 %v1050
    %v1064 = vpop.f32.mrf.mxu0
    %v1065 = vadd.f32 0.0, %v1064
    %v1066 = vpop.f32.mrf.mxu0
    %v1067 = vadd.f32 0.0, %v1066
    %1068 = vdwg.mxu0
    %v1069 = vpack.c.bf16 %v1065, %v1065
    %v1070 = vpack.c.bf16 %v1067, %v1067
    %v1073 = vunpack.c.l.b16 %v1069
    %v1074 = vunpack.c.l.b16 %v1070
    %v1075 = vpack.c.b16 %v1074, %v1073
    %1077 = vrot.lane.b32.xlu0 %v1075, 108
    %v1078 = vpop.permute.xlu0 %1077
    %1080 = vrot.lane.b32.xlu0 %v1075, 88
    %v1081 = vpop.permute.xlu0 %1080
    %1083 = vrot.lane.b32.xlu0 %v1075, 68
    %v1084 = vpop.permute.xlu0 %1083
    %v1086 = vld [vmem:[%s1 + $0xa8] sm:$0xf]
    %v1087 = vld [vmem:[%s1 + $0xb4] sm:$0xf]
    %v1088 = vld [vmem:[#allocation2 + $0x10] sm:$0x1]
    %v1089 = vperm.slane %v1088, 0
    %v1092 = vunpack.c.l.b16 %v1086
    %v1093 = vunpack.c.l.b16 %v1087
    %v1094 = vpack.c.b16 %v1093, %v1092
    %vm1095 = vcmask 523264
    %v1097 = vsel %vm1095, %v1094, 0
    %1099 = vmatpush.bf16.msra.mxu0 0
    %1100 = vmatpush.bf16.msra.mxu0 0
    %1101 = vmatpush.bf16.msra.mxu0 0
    %1102 = vmatpush.bf16.msra.mxu0 0
    %1103 = vmatpush.bf16.msra.mxu0 %v1084
    %1104 = vmatpush.bf16.msra.mxu0 %v1081
    %1105 = vmatpush.bf16.msra.mxu0 %v1078
    %1106 = vmatpush.bf16.msra.mxu0 %v1075
    %1107 = vmatmul.bf16.gmra.mxu0 %v1097
    %v1108 = vpop.f32.mrf.mxu0
    %v1109 = vadd.f32 %v1089, %v1108
    %v1110 = vpop.f32.mrf.mxu0
    %v1111 = vadd.f32 %v1089, %v1110
    %1112 = vdwg.mxu0
    %v1113 = vpack.c.bf16 %v1111, %v1109
    %v1114 = vld [vmem:[%s1 + $0xc0] sm:$0xff]
    %v1115 = vld [vmem:[%s1 + $0xc8] sm:$0xf]
    %v1116 = vld [vmem:[%s1 + $0xcc] sm:$0xff]
    %v1117 = vld [vmem:[%s1 + $0xd4] sm:$0xf]
    %v1118 = vld [vmem:[%s1 + $0xd8] sm:$0x33]
    %v1119 = vld [vmem:[%s1 + $0xe0] sm:$0x3]
    %v1126 = vunpack.c.l.b16 %v1114
    %v1127 = vunpack.c.h.b16 %v1114
    %v1128 = vunpack.c.l.b16 %v1115
    %v1129 = vunpack.c.l.b16 %v1116
    %v1130 = vunpack.c.h.b16 %v1116
    %v1131 = vunpack.c.l.b16 %v1117
    %v1132 = vunpack.c.l.b16 %v1118
    %v1133 = vunpack.c.h.b16 %v1118
    %v1134 = vunpack.c.l.b16 %v1119
    %v1135 = vpack.c.b16 %v1129, %v1126
    %v1136 = vpack.c.b16 %v1130, %v1127
    %v1137 = vpack.c.b16 %v1131, %v1128
    %v1138 = vpack.c.b16 %v1132, %v1132
    %v1139 = vpack.c.b16 %v1133, %v1133
    %v1140 = vpack.c.b16 %v1134, %v1134
    %vm1144 = vcmask 162816
    %v1146 = vsel %vm1144, %v1113, 0
    %vm1148 = vcmask 1041408
    %v1150 = vsel %vm1148, %v1138, 0
    %v1153 = vsel %vm1148, %v1139, 0
    %v1156 = vsel %vm1148, %v1140, 0
    %1158 = vmatpush.bf16.msra.mxu0 0
    %1159 = vmatpush.bf16.msra.mxu0 0
    %1160 = vmatpush.bf16.msra.mxu0 0
    %1161 = vmatpush.bf16.msra.mxu0 0
    %1162 = vmatpush.bf16.msra.mxu0 0
    %1163 = vmatpush.bf16.msra.mxu0 0
    %1164 = vmatpush.bf16.msra.mxu0 %v1150
    %1165 = vmatpush.bf16.msra.mxu0 %v1135
    %1166 = vmatmul.bf16.gmra.mxu0 %v1146
    %v1167 = vpop.f32.mrf.mxu0
    %v1168 = vadd.f32 0.0, %v1167
    %v1169 = vpop.f32.mrf.mxu0
    %v1170 = vadd.f32 0.0, %v1169
    %1171 = vdwg.mxu0
    %1172 = vmatpush.bf16.msra.mxu0 0
    %1173 = vmatpush.bf16.msra.mxu0 0
    %1174 = vmatpush.bf16.msra.mxu0 0
    %1175 = vmatpush.bf16.msra.mxu0 0
    %1176 = vmatpush.bf16.msra.mxu0 0
    %1177 = vmatpush.bf16.msra.mxu0 0
    %1178 = vmatpush.bf16.msra.mxu0 %v1153
    %1179 = vmatpush.bf16.msra.mxu0 %v1136
    %1180 = vmatmul.bf16.gmra.mxu0 %v1146
    %v1181 = vpop.f32.mrf.mxu0
    %v1182 = vadd.f32 0.0, %v1181
    %v1183 = vpop.f32.mrf.mxu0
    %v1184 = vadd.f32 0.0, %v1183
    %1185 = vdwg.mxu0
    %1186 = vmatpush.bf16.msra.mxu0 0
    %1187 = vmatpush.bf16.msra.mxu0 0
    %1188 = vmatpush.bf16.msra.mxu0 0
    %1189 = vmatpush.bf16.msra.mxu0 0
    %1190 = vmatpush.bf16.msra.mxu0 0
    %1191 = vmatpush.bf16.msra.mxu0 0
    %1192 = vmatpush.bf16.msra.mxu0 %v1156
    %1193 = vmatpush.bf16.msra.mxu0 %v1137
    %1194 = vmatmul.bf16.gmra.mxu0 %v1146
    %v1195 = vpop.f32.mrf.mxu0
    %v1196 = vadd.f32 0.0, %v1195
    %v1197 = vpop.f32.mrf.mxu0
    %v1198 = vadd.f32 0.0, %v1197
    %1199 = vdwg.mxu0
    %v1200 = vpack.c.bf16 %v1182, %v1168
    %v1201 = vpack.c.bf16 %v1196, %v1196
    %v1202 = vpack.c.bf16 %v1184, %v1170
    %v1203 = vpack.c.bf16 %v1198, %v1198
    %v1206 = vunpack.c.l.b16 %v1200
    %v1207 = vunpack.c.l.b16 %v1202
    %v1208 = vpack.c.b16 %v1207, %v1206
    %1210 = vrot.lane.b32.xlu0 %v1208, 108
    %v1211 = vpop.permute.xlu0 %1210
    %1213 = vrot.lane.b32.xlu0 %v1208, 88
    %v1214 = vpop.permute.xlu0 %1213
    %1216 = vrot.lane.b32.xlu0 %v1208, 68
    %v1217 = vpop.permute.xlu0 %1216
    %1219 = vrot.lane.b32.xlu0 %v1208, 48
    %v1220 = vpop.permute.xlu0 %1219
    %1222 = vrot.lane.b32.xlu0 %v1208, 28
    %v1223 = vpop.permute.xlu0 %1222
    %v1225 = vunpack.c.h.b16 %v1200
    %v1226 = vunpack.c.h.b16 %v1202
    %v1227 = vpack.c.b16 %v1226, %v1225
    %1228 = vrot.lane.b32.xlu0 %v1208, 8
    %v1229 = vpop.permute.xlu0 %1228
    %1230 = vrot.lane.b32.xlu0 %v1227, 8
    %v1231 = vpop.permute.xlu0 %1230
    %vm1232 = vcmask 64512
    %v1233 = vsel %vm1232, %v1229, %v1231
    %1235 = vrot.lane.b32.xlu0 %v1227, 116
    %v1236 = vpop.permute.xlu0 %1235
    %1238 = vrot.lane.b32.xlu0 %v1227, 96
    %v1239 = vpop.permute.xlu0 %1238
    %1241 = vrot.lane.b32.xlu0 %v1227, 76
    %v1242 = vpop.permute.xlu0 %1241
    %1244 = vrot.lane.b32.xlu0 %v1227, 56
    %v1245 = vpop.permute.xlu0 %1244
    %1247 = vrot.lane.b32.xlu0 %v1227, 36
    %v1248 = vpop.permute.xlu0 %1247
    %v1252 = vunpack.c.l.b16 %v1201
    %v1253 = vunpack.c.l.b16 %v1203
    %v1254 = vpack.c.b16 %v1253, %v1252
    %1255 = vrot.lane.b32.xlu0 %v1227, 16
    %v1256 = vpop.permute.xlu0 %1255
    %1257 = vrot.lane.b32.xlu0 %v1254, 16
    %v1258 = vpop.permute.xlu0 %1257
    %vm1259 = vcmask 130048
    %v1260 = vsel %vm1259, %v1256, %v1258
    %1262 = vrot.lane.b32.xlu0 %v1254, 124
    %v1263 = vpop.permute.xlu0 %1262
    %1265 = vrot.lane.b32.xlu0 %v1254, 104
    %v1266 = vpop.permute.xlu0 %1265
    %v1268 = vld [vmem:[%s1 + $0xf0] sm:$0xff]
    %v1269 = vld [vmem:[%s1 + $0xfc] sm:$0xff]
    %v1270 = vld [vmem:[#allocation2 + $0x18] sm:$0x1]
    %v1271 = vperm.slane %v1270, 0
    %v1274 = vunpack.c.l.b16 %v1268
    %v1275 = vunpack.c.h.b16 %v1268
    %v1276 = vunpack.c.l.b16 %v1269
    %v1277 = vunpack.c.h.b16 %v1269
    %v1278 = vpack.c.b16 %v1276, %v1274
    %v1279 = vpack.c.b16 %v1277, %v1275
    %vm1281 = vcmask 916480
    %v1283 = vsel %vm1281, %v1279, 0
    %1285 = vmatpush.bf16.msra.mxu0 %v1236
    %1286 = vmatpush.bf16.msra.mxu0 %v1233
    %1287 = vmatpush.bf16.msra.mxu0 %v1223
    %1288 = vmatpush.bf16.msra.mxu0 %v1220
    %1289 = vmatpush.bf16.msra.mxu0 %v1217
    %1290 = vmatpush.bf16.msra.mxu0 %v1214
    %1291 = vmatpush.bf16.msra.mxu0 %v1211
    %1292 = vmatpush.bf16.msra.mxu0 %v1208
    %1293 = vmatmul.bf16.gmra.mxu0 %v1278
    %v1294 = vpop.f32.mrf.mxu0
    %v1295 = vadd.f32 %v1271, %v1294
    %v1296 = vpop.f32.mrf.mxu0
    %v1297 = vadd.f32 %v1271, %v1296
    %1298 = vdwg.mxu0
    %1299 = vmatpush.bf16.msra.mxu0 0
    %1300 = vmatpush.bf16.msra.mxu0 %v1266
    %1301 = vmatpush.bf16.msra.mxu0 %v1263
    %1302 = vmatpush.bf16.msra.mxu0 %v1260
    %1303 = vmatpush.bf16.msra.mxu0 %v1248
    %1304 = vmatpush.bf16.msra.mxu0 %v1245
    %1305 = vmatpush.bf16.msra.mxu0 %v1242
    %1306 = vmatpush.bf16.msra.mxu0 %v1239
    %1307 = vmatmul.bf16.gmra.mxu0 %v1283
    %v1308 = vpop.f32.mrf.mxu0
    %v1309 = vadd.f32 %v1295, %v1308
    %v1310 = vpop.f32.mrf.mxu0
    %v1311 = vadd.f32 %v1297, %v1310
    %1312 = vdwg.mxu0
    %v1313 = vmax.f32 %v1309, 0.0
    %v1314 = vmax.f32 %v1311, 0.0
    %v1315 = vpack.c.bf16 %v1314, %v1313
    %v1316 = vld [vmem:[%s1 + $0x120] sm:$0xf]
    %v1317 = vld [vmem:[%s1 + $0x12c] sm:$0xf]
    %v1318 = vld [vmem:[%s1 + $0x138] sm:$0x3]
    %v1322 = vunpack.c.l.b16 %v1316
    %v1323 = vunpack.c.l.b16 %v1317
    %v1324 = vunpack.c.l.b16 %v1318
    %v1325 = vpack.c.b16 %v1323, %v1322
    %v1326 = vpack.c.b16 %v1324, %v1324
    %v1329 = vsel %vm1144, %v1315, 0
    %v1332 = vsel %vm1148, %v1326, 0
    %1334 = vmatpush.bf16.msra.mxu0 0
    %1335 = vmatpush.bf16.msra.mxu0 0
    %1336 = vmatpush.bf16.msra.mxu0 0
    %1337 = vmatpush.bf16.msra.mxu0 0
    %1338 = vmatpush.bf16.msra.mxu0 0
    %1339 = vmatpush.bf16.msra.mxu0 0
    %1340 = vmatpush.bf16.msra.mxu0 %v1332
    %1341 = vmatpush.bf16.msra.mxu0 %v1325
    %1342 = vmatmul.bf16.gmra.mxu0 %v1329
    %v1343 = vpop.f32.mrf.mxu0
    %v1344 = vadd.f32 0.0, %v1343
    %v1345 = vpop.f32.mrf.mxu0
    %v1346 = vadd.f32 0.0, %v1345
    %1347 = vdwg.mxu0
    %v1348 = vld [vmem:[%s1 + $0x108] sm:$0xf]
    %v1349 = vld [vmem:[%s1 + $0x114] sm:$0xf]
    %v1350 = vpack.c.bf16 %v1346, %v1344
    %v1351 = vld [vmem:[#allocation2 + $0x20] sm:$0x1]
    %v1352 = vperm.slane %v1351, 0
    %v1355 = vunpack.c.l.b16 %v1348
    %v1356 = vunpack.c.l.b16 %v1349
    %v1357 = vpack.c.b16 %v1356, %v1355
    %vm1358 = vcmask 130048
    %v1360 = vsel %vm1358, %v1357, 0
    %1362 = vmatpush.bf16.msra.mxu0 0
    %1363 = vmatpush.bf16.msra.mxu0 0
    %1364 = vmatpush.bf16.msra.mxu0 0
    %1365 = vmatpush.bf16.msra.mxu0 0
    %1366 = vmatpush.bf16.msra.mxu0 0
    %1367 = vmatpush.bf16.msra.mxu0 0
    %1368 = vmatpush.bf16.msra.mxu0 0
    %1369 = vmatpush.bf16.msra.mxu0 %v1350
    %1370 = vmatmul.bf16.gmra.mxu0 %v1360
    %v1371 = vpop.f32.mrf.mxu0
    %v1372 = vadd.f32 %v1352, %v1371
    %v1373 = vpop.f32.mrf.mxu0
    %v1374 = vadd.f32 %v1352, %v1373
    %1375 = vdwg.mxu0
    %1376 = vst.msk [vmem:[#allocation5] sm:$0xff] %vm1144, %v1372
    %1377 = vst.msk [vmem:[#allocation5 + $0x8] sm:$0xff] %vm1144, %v1374
    // Predicated region
    $region18: #{_fwd.1} parent=1 // pred_check
      _
    $region19: #{_fwd.1} parent=1 // pred_check_branch
      %1379 = sbr.rel (0) target = $region21
    $region20: #{_fwd.1} parent=1 // pred_region
      %1381 = vsyncadd [#allocation4], 0
      %s1382 = sshll.u32 [#allocation5], 4
      %s1383 = int_to_ptr.vmem [resolvable:$true] %s1382
      %s1384 = sshll.u32 %s3, 4
      %s1385 = int_to_ptr.hbm [resolvable:$true] %s1384
      %1390 = dma.vmem_to_hbm [thread:$0]  %s1383, 256, %s1385, [#allocation4], 128, 128, 8
    $region21: #{_fwd.1} parent=1 // pred_fallthru
      _
    // Predicated region
    $region22: #{_fwd.1} parent=1 // pred_check
      _
    $region23: #{_fwd.1} parent=1 // pred_check_branch
      %1392 = sbr.rel (0) target = $region25
    $region24: #{_fwd.1} parent=1 // pred_region
      %1394 = dma.done [#allocation4], 256
    $region25: #{_fwd.1} parent=1 // pred_fallthru
      _
    %1395 = vsyncpa [#allocation3], 1
    %1396 = vsyncpa [#allocation4], 1

</llo_original>
